<compile_context>
chip_gen: v5e
topology: v5e:2x2
jax: 0.10.0
libtpu: 0.0.40
codegen_flags: <defaults>
</compile_context>

<pallas_src>
import math
import functools

import jax
import jax.numpy as jnp
from jax.experimental import pallas as pl
from jax.experimental.pallas import tpu as pltpu

LN_EPS = 1e-5  # PyTorch nn.LayerNorm default


def _layer_norm(x, gamma, beta):
    mu = jnp.mean(x, axis=-1, keepdims=True)
    var = jnp.mean((x - mu) ** 2, axis=-1, keepdims=True)
    return (x - mu) * jax.lax.rsqrt(var + LN_EPS) * gamma + beta


def _gelu_exact(x):
    # nn.GELU default (erf-based, non-approximate)
    return 0.5 * x * (1.0 + jax.lax.erf(x * (1.0 / math.sqrt(2.0))))


def _block_kernel(x_ref, g1_ref, be1_ref, wq_ref, wkv_ref, wp_ref, bp_ref,
                  g2_ref, be2_ref, w1_ref, bf1_ref, w2_ref, bf2_ref,
                  o_ref, k_sc, v_sc, q_sc, *, num_heads, head_dim, tq, scale):
    H, hd = num_heads, head_dim
    C = H * hd
    n_tok = x_ref.shape[1]
    qi = pl.program_id(1)

    # ---- once per batch element (first q-tile): LN1 + fused K/V projection, all tokens ----
    @pl.when(qi == 0)
    def _():
        x_all = x_ref[0]                                                     # (N, C) f32
        xn = _layer_norm(x_all, g1_ref[0], be1_ref[0]).astype(jnp.bfloat16)
        kvf = jnp.dot(xn, wkv_ref[...], preferred_element_type=jnp.float32)  # (N, 2C) f32
        for h in range(H):        # static unroll: lane slice -> head-major VMEM scratch
            k_sc[h] = kvf[:, h * hd:(h + 1) * hd].astype(jnp.bfloat16)
            v_sc[h] = kvf[:, C + h * hd:C + (h + 1) * hd].astype(jnp.bfloat16)

    # ---- current query tile ----
    if tq == n_tok:                      # single-tile case: no dynamic slice needed
        xq = x_ref[0]                                                        # (TQ, C) f32
    else:
        row0 = pl.multiple_of(qi * tq, tq)
        xq = x_ref[0, pl.ds(row0, tq), :]                                    # (TQ, C) f32
    xnq = _layer_norm(xq, g1_ref[0], be1_ref[0]).astype(jnp.bfloat16)
    # softmax scale folded into q (scales (TQ, hd) per head, not the (TQ, N) scores)
    qf = jnp.dot(xnq, wq_ref[...], preferred_element_type=jnp.float32) * scale
    for h in range(H):
        q_sc[h] = qf[:, h * hd:(h + 1) * hd].astype(jnp.bfloat16)

    # ---- batched multi-head attention (head axis = batch dim of the dots) ----
    s = jnp.einsum('htd,hnd->htn', q_sc[...], k_sc[...],
                   preferred_element_type=jnp.float32)                       # (H, TQ, N)
    s = s - jnp.max(s, axis=-1, keepdims=True)
    p = jnp.exp(s)
    p = p * pl.reciprocal(jnp.sum(p, axis=-1, keepdims=True), approx=True)
    oh = jnp.einsum('htn,hnd->htd', p.astype(jnp.bfloat16), v_sc[...],
                    preferred_element_type=jnp.float32)                      # (H, TQ, hd)
    o_merged = jnp.concatenate([oh[h] for h in range(H)], axis=-1)           # (TQ, C)
    attn = jnp.dot(o_merged.astype(jnp.bfloat16), wp_ref[...],
                   preferred_element_type=jnp.float32) + bp_ref[0]

    xr = xq + attn                                                           # residual 1

    # ---- LayerNorm 2 + MLP + residual 2 ----
    xn2 = _layer_norm(xr, g2_ref[0], be2_ref[0]).astype(jnp.bfloat16)
    h1 = jnp.dot(xn2, w1_ref[...], preferred_element_type=jnp.float32) + bf1_ref[0]
    h1 = _gelu_exact(h1).astype(jnp.bfloat16)
    h2 = jnp.dot(h1, w2_ref[...], preferred_element_type=jnp.float32) + bf2_ref[0]

    o_ref[0] = xr + h2


def _pick_tq(n_tok, cap=256):
    """Largest q-tile <= cap that divides N and keeps the sublane dim a multiple of 8."""
    if n_tok <= cap:
        return n_tok
    t = cap - cap % 8
    while t >= 8:
        if n_tok % t == 0:
            return t
        t -= 8
    return n_tok   # fallback: single tile


def block_forward(x, params, num_heads, dim=None, tq=None):
    """x: (B, N, C) float32, N = D*H*W.  `dim` (spatial) is unused for sr_ratio=1."""
    del dim
    B, N, C = x.shape
    assert C % num_heads == 0
    head_dim = C // num_heads
    scale = head_dim ** -0.5

    g1, be1, wq, wkv, wp, bp, g2, be2, w1, bf1, w2, bf2 = params

    bf16 = jnp.bfloat16
    # MXU operands pre-cast to bf16 (fp32 accumulation in-kernel); LN params / biases fp32.
    plist = [g1.reshape(1, -1), be1.reshape(1, -1),
             wq.astype(bf16), wkv.astype(bf16),
             wp.astype(bf16), bp.reshape(1, -1),
             g2.reshape(1, -1), be2.reshape(1, -1),
             w1.astype(bf16), bf1.reshape(1, -1), w2.astype(bf16), bf2.reshape(1, -1)]

    if tq is None:
        tq = _pick_tq(N)
    assert N % tq == 0, (N, tq)
    n_q = N // tq

    def full_spec(shape):
        zeros = (0,) * len(shape)
        return pl.BlockSpec(shape, lambda b, i: zeros)

    kernel = functools.partial(_block_kernel, num_heads=num_heads,
                               head_dim=head_dim, tq=tq, scale=scale)

    return pl.pallas_call(
        kernel,
        out_shape=jax.ShapeDtypeStruct((B, N, C), jnp.float32),
        grid=(B, n_q),
        in_specs=[pl.BlockSpec((1, N, C), lambda b, i: (b, 0, 0))]   # resident per batch
                 + [full_spec(p.shape) for p in plist],
        out_specs=pl.BlockSpec((1, tq, C), lambda b, i: (b, i, 0)),
        scratch_shapes=[pltpu.VMEM((num_heads, N, head_dim), bf16),    # K, head-major
                        pltpu.VMEM((num_heads, N, head_dim), bf16),    # V, head-major
                        pltpu.VMEM((num_heads, tq, head_dim), bf16)],  # Q tile, head-major
        compiler_params=pltpu.CompilerParams(
            dimension_semantics=("parallel", "arbitrary"),
            vmem_limit_bytes=48 * 1024 * 1024),
    )(x, *plist)


def block_reference(x, params, num_heads):
    """Pure-JAX fp32 reference matching the PyTorch forward (eval mode, sr_ratio=1)."""
    g1, be1, wq, wkv, wp, bp, g2, be2, w1, bf1, w2, bf2 = params
    B, N, C = x.shape
    hd = C // num_heads

    xn = _layer_norm(x, g1, be1)
    q = xn @ wq
    kv = xn @ wkv
    k, v = kv[..., :C], kv[..., C:]

    def split(t):
        return t.reshape(B, N, num_heads, hd).transpose(0, 2, 1, 3)

    qh, kh, vh = split(q), split(k), split(v)
    attn = jax.nn.softmax((qh @ kh.transpose(0, 1, 3, 2)) * hd ** -0.5, axis=-1)
    o = (attn @ vh).transpose(0, 2, 1, 3).reshape(B, N, C)
    o = o @ wp + bp
    x = x + o

    xn2 = _layer_norm(x, g2, be2)
    h = _gelu_exact(xn2 @ w1 + bf1)
    return x + h @ w2 + bf2


def init_params(key, C, mlp_hidden):
    ks = jax.random.split(key, 12)
    s = 0.05
    g1 = 1.0 + 0.1 * jax.random.normal(ks[0], (C,), jnp.float32)
    be1 = 0.1 * jax.random.normal(ks[1], (C,), jnp.float32)
    wq = s * jax.random.normal(ks[2], (C, C), jnp.float32)          # (in, out), no bias
    wkv = s * jax.random.normal(ks[3], (C, 2 * C), jnp.float32)     # (in, 2C),  no bias
    wp = s * jax.random.normal(ks[4], (C, C), jnp.float32)
    bp = s * jax.random.normal(ks[5], (C,), jnp.float32)
    g2 = 1.0 + 0.1 * jax.random.normal(ks[6], (C,), jnp.float32)
    be2 = 0.1 * jax.random.normal(ks[7], (C,), jnp.float32)
    w1 = s * jax.random.normal(ks[8], (C, mlp_hidden), jnp.float32)
    bf1 = s * jax.random.normal(ks[9], (mlp_hidden,), jnp.float32)
    w2 = s * jax.random.normal(ks[10], (mlp_hidden, C), jnp.float32)
    bf2 = s * jax.random.normal(ks[11], (C,), jnp.float32)
    return (g1, be1, wq, wkv, wp, bp, g2, be2, w1, bf1, w2, bf2)


if __name__ == "__main__":
    key = jax.random.PRNGKey(0)
    k_x, k_p = jax.random.split(key)

    B = 2
    C = 32                 # embedding dim
    num_heads = 4
    mlp_ratio = 4.0
    spatial = (2, 4, 4)    # (D, H, W) -> N = 32 tokens
    N = spatial[0] * spatial[1] * spatial[2]
    mlp_hidden = int(C * mlp_ratio)

    x = jax.random.normal(k_x, (B, N, C), jnp.float32)
    params = init_params(k_p, C, mlp_hidden)

    out = block_forward(x, params, num_heads, dim=spatial)
    out = jax.block_until_ready(out)

    ref = block_reference(x, params, num_heads)
    assert out.shape == (B, N, C)
    max_err = float(jnp.max(jnp.abs(out - ref)))
    # bf16 MXU operands + approx reciprocal: fp32-accumulated result stays well inside 1e-2
    assert jnp.allclose(out, ref, atol=1e-2, rtol=1e-2), max_err

    print("KERNEL_OK")
</pallas_src>

<mosaic_0001>
module attributes {stable_mosaic.version = 11 : i64} {
  func.func @_block_kernel(%arg0: i32, %arg1: i32, %arg2: memref<1x32x32xf32, #tpu.memory_space<vmem>>, %arg3: memref<1x32xf32, #tpu.memory_space<vmem>>, %arg4: memref<1x32xf32, #tpu.memory_space<vmem>>, %arg5: memref<32x32xbf16, #tpu.memory_space<vmem>>, %arg6: memref<32x64xbf16, #tpu.memory_space<vmem>>, %arg7: memref<32x32xbf16, #tpu.memory_space<vmem>>, %arg8: memref<1x32xf32, #tpu.memory_space<vmem>>, %arg9: memref<1x32xf32, #tpu.memory_space<vmem>>, %arg10: memref<1x32xf32, #tpu.memory_space<vmem>>, %arg11: memref<32x128xbf16, #tpu.memory_space<vmem>>, %arg12: memref<1x128xf32, #tpu.memory_space<vmem>>, %arg13: memref<128x32xbf16, #tpu.memory_space<vmem>>, %arg14: memref<1x32xf32, #tpu.memory_space<vmem>>, %arg15: memref<1x32x32xf32, #tpu.memory_space<vmem>>, %arg16: memref<4x32x8xbf16, #tpu.memory_space<vmem>>, %arg17: memref<4x32x8xbf16, #tpu.memory_space<vmem>>, %arg18: memref<4x32x8xbf16, #tpu.memory_space<vmem>>) attributes {dimension_semantics = [#tpu.dimension_semantics<parallel>, #tpu.dimension_semantics<arbitrary>], iteration_bounds = array<i64: 2, 1>, scalar_prefetch = 0 : i64, scratch_operands = 3 : i64, tpu.core_type = #tpu.core_type<tc>, window_params = [{transform_indices = @transform_0, window_bounds = array<i64: 1, 32, 32>}, {pipeline_mode = #tpu.pipeline_mode<synchronous>, transform_indices = @transform_1, window_bounds = array<i64: 1, 32>}, {pipeline_mode = #tpu.pipeline_mode<synchronous>, transform_indices = @transform_2, window_bounds = array<i64: 1, 32>}, {pipeline_mode = #tpu.pipeline_mode<synchronous>, transform_indices = @transform_3, window_bounds = array<i64: 32, 32>}, {pipeline_mode = #tpu.pipeline_mode<synchronous>, transform_indices = @transform_4, window_bounds = array<i64: 32, 64>}, {pipeline_mode = #tpu.pipeline_mode<synchronous>, transform_indices = @transform_5, window_bounds = array<i64: 32, 32>}, {pipeline_mode = #tpu.pipeline_mode<synchronous>, transform_indices = @transform_6, window_bounds = array<i64: 1, 32>}, {pipeline_mode = #tpu.pipeline_mode<synchronous>, transform_indices = @transform_7, window_bounds = array<i64: 1, 32>}, {pipeline_mode = #tpu.pipeline_mode<synchronous>, transform_indices = @transform_8, window_bounds = array<i64: 1, 32>}, {pipeline_mode = #tpu.pipeline_mode<synchronous>, transform_indices = @transform_9, window_bounds = array<i64: 32, 128>}, {pipeline_mode = #tpu.pipeline_mode<synchronous>, transform_indices = @transform_10, window_bounds = array<i64: 1, 128>}, {pipeline_mode = #tpu.pipeline_mode<synchronous>, transform_indices = @transform_11, window_bounds = array<i64: 128, 32>}, {pipeline_mode = #tpu.pipeline_mode<synchronous>, transform_indices = @transform_12, window_bounds = array<i64: 1, 32>}, {transform_indices = @transform_13, window_bounds = array<i64: 1, 32, 32>}]} {
    %c0_i32 = arith.constant 0 : i32
    %0 = arith.cmpi eq, %arg1, %c0_i32 : i32
    %1 = arith.extui %0 : i1 to i32
    %c0_i32_0 = arith.constant 0 : i32
    %2 = arith.cmpi ne, %1, %c0_i32_0 : i32
    scf.if %2 {
      %c0_67 = arith.constant 0 : index
      %c0_68 = arith.constant 0 : index
      %c0_69 = arith.constant 0 : index
      %148 = vector.load %arg2[%c0_67, %c0_68, %c0_69] : memref<1x32x32xf32, #tpu.memory_space<vmem>>, vector<1x32x32xf32>
      %149 = vector.shape_cast %148 : vector<1x32x32xf32> to vector<32x32xf32>
      %c0_70 = arith.constant 0 : index
      %c0_71 = arith.constant 0 : index
      %150 = vector.load %arg3[%c0_70, %c0_71] : memref<1x32xf32, #tpu.memory_space<vmem>>, vector<1x32xf32>
      %151 = vector.shape_cast %150 : vector<1x32xf32> to vector<32xf32>
      %c0_72 = arith.constant 0 : index
      %c0_73 = arith.constant 0 : index
      %152 = vector.load %arg4[%c0_72, %c0_73] : memref<1x32xf32, #tpu.memory_space<vmem>>, vector<1x32xf32>
      %153 = vector.shape_cast %152 : vector<1x32xf32> to vector<32xf32>
      %cst_74 = arith.constant dense<0.000000e+00> : vector<32xf32>
      %154 = vector.multi_reduction <add>, %149, %cst_74 [1] : vector<32x32xf32> to vector<32xf32>
      %155 = vector.shape_cast %154 : vector<32xf32> to vector<32x1xf32>
      %cst_75 = arith.constant 3.200000e+01 : f32
      %156 = vector.broadcast %cst_75 : f32 to vector<32x1xf32>
      %157 = arith.divf %155, %156 : vector<32x1xf32>
      %158 = vector.broadcast %157 : vector<32x1xf32> to vector<32x32xf32>
      %159 = arith.subf %149, %158 : vector<32x32xf32>
      %160 = arith.mulf %159, %159 : vector<32x32xf32>
      %cst_76 = arith.constant dense<0.000000e+00> : vector<32xf32>
      %161 = vector.multi_reduction <add>, %160, %cst_76 [1] : vector<32x32xf32> to vector<32xf32>
      %162 = vector.shape_cast %161 : vector<32xf32> to vector<32x1xf32>
      %cst_77 = arith.constant 3.200000e+01 : f32
      %163 = vector.broadcast %cst_77 : f32 to vector<32x1xf32>
      %164 = arith.divf %162, %163 : vector<32x1xf32>
      %165 = vector.broadcast %157 : vector<32x1xf32> to vector<32x32xf32>
      %166 = arith.subf %149, %165 : vector<32x32xf32>
      %cst_78 = arith.constant 9.99999974E-6 : f32
      %167 = vector.broadcast %cst_78 : f32 to vector<32x1xf32>
      %168 = arith.addf %164, %167 : vector<32x1xf32>
      %169 = math.rsqrt %168 : vector<32x1xf32>
      %170 = vector.broadcast %169 : vector<32x1xf32> to vector<32x32xf32>
      %171 = arith.mulf %166, %170 : vector<32x32xf32>
      %172 = vector.shape_cast %151 : vector<32xf32> to vector<1x32xf32>
      %173 = vector.broadcast %172 : vector<1x32xf32> to vector<32x32xf32>
      %174 = arith.mulf %171, %173 : vector<32x32xf32>
      %175 = vector.shape_cast %153 : vector<32xf32> to vector<1x32xf32>
      %176 = vector.broadcast %175 : vector<1x32xf32> to vector<32x32xf32>
      %177 = arith.addf %174, %176 : vector<32x32xf32>
      %178 = arith.truncf %177 : vector<32x32xf32> to vector<32x32xbf16>
      %c0_79 = arith.constant 0 : index
      %c0_80 = arith.constant 0 : index
      %179 = vector.load %arg6[%c0_79, %c0_80] : memref<32x64xbf16, #tpu.memory_space<vmem>>, vector<32x64xbf16>
      %cst_81 = arith.constant dense<0.000000e+00> : vector<32x64xf32>
      %180 = tpu.matmul %178, %179, %cst_81 {dimension_numbers = #tpu.dot_dimension_numbers<[1], [0], [0], [1], [0, 0, 1, 1], [], []>} : vector<32x32xbf16>, vector<32x64xbf16>, vector<32x64xf32> -> vector<32x64xf32>
      %181 = vector.extract_strided_slice %180 {offsets = [0, 0], sizes = [32, 8], strides = [1, 1]} : vector<32x64xf32> to vector<32x8xf32>
      %182 = arith.truncf %181 : vector<32x8xf32> to vector<32x8xbf16>
      %c0_82 = arith.constant 0 : index
      %c0_83 = arith.constant 0 : index
      %c0_84 = arith.constant 0 : index
      %183 = vector.load %arg16[%c0_82, %c0_83, %c0_84] : memref<4x32x8xbf16, #tpu.memory_space<vmem>>, vector<1x32x8xbf16>
      %184 = vector.shape_cast %183 : vector<1x32x8xbf16> to vector<32x8xbf16>
      %185 = vector.shape_cast %182 : vector<32x8xbf16> to vector<1x32x8xbf16>
      tpu.vector_store %arg16[%c0_82, %c0_83, %c0_84], %185 {strides = array<i32>} : memref<4x32x8xbf16, #tpu.memory_space<vmem>>, vector<1x32x8xbf16>,
      %186 = vector.extract_strided_slice %180 {offsets = [0, 32], sizes = [32, 8], strides = [1, 1]} : vector<32x64xf32> to vector<32x8xf32>
      %187 = arith.truncf %186 : vector<32x8xf32> to vector<32x8xbf16>
      %c0_85 = arith.constant 0 : index
      %c0_86 = arith.constant 0 : index
      %c0_87 = arith.constant 0 : index
      %188 = vector.load %arg17[%c0_85, %c0_86, %c0_87] : memref<4x32x8xbf16, #tpu.memory_space<vmem>>, vector<1x32x8xbf16>
      %189 = vector.shape_cast %188 : vector<1x32x8xbf16> to vector<32x8xbf16>
      %190 = vector.shape_cast %187 : vector<32x8xbf16> to vector<1x32x8xbf16>
      tpu.vector_store %arg17[%c0_85, %c0_86, %c0_87], %190 {strides = array<i32>} : memref<4x32x8xbf16, #tpu.memory_space<vmem>>, vector<1x32x8xbf16>,
      %191 = vector.extract_strided_slice %180 {offsets = [0, 8], sizes = [32, 8], strides = [1, 1]} : vector<32x64xf32> to vector<32x8xf32>
      %192 = arith.truncf %191 : vector<32x8xf32> to vector<32x8xbf16>
      %c1_88 = arith.constant 1 : index
      %c0_89 = arith.constant 0 : index
      %c0_90 = arith.constant 0 : index
      %193 = vector.load %arg16[%c1_88, %c0_89, %c0_90] : memref<4x32x8xbf16, #tpu.memory_space<vmem>>, vector<1x32x8xbf16>
      %194 = vector.shape_cast %193 : vector<1x32x8xbf16> to vector<32x8xbf16>
      %195 = vector.shape_cast %192 : vector<32x8xbf16> to vector<1x32x8xbf16>
      tpu.vector_store %arg16[%c1_88, %c0_89, %c0_90], %195 {strides = array<i32>} : memref<4x32x8xbf16, #tpu.memory_space<vmem>>, vector<1x32x8xbf16>,
      %196 = vector.extract_strided_slice %180 {offsets = [0, 40], sizes = [32, 8], strides = [1, 1]} : vector<32x64xf32> to vector<32x8xf32>
      %197 = arith.truncf %196 : vector<32x8xf32> to vector<32x8xbf16>
      %c1_91 = arith.constant 1 : index
      %c0_92 = arith.constant 0 : index
      %c0_93 = arith.constant 0 : index
      %198 = vector.load %arg17[%c1_91, %c0_92, %c0_93] : memref<4x32x8xbf16, #tpu.memory_space<vmem>>, vector<1x32x8xbf16>
      %199 = vector.shape_cast %198 : vector<1x32x8xbf16> to vector<32x8xbf16>
      %200 = vector.shape_cast %197 : vector<32x8xbf16> to vector<1x32x8xbf16>
      tpu.vector_store %arg17[%c1_91, %c0_92, %c0_93], %200 {strides = array<i32>} : memref<4x32x8xbf16, #tpu.memory_space<vmem>>, vector<1x32x8xbf16>,
      %201 = vector.extract_strided_slice %180 {offsets = [0, 16], sizes = [32, 8], strides = [1, 1]} : vector<32x64xf32> to vector<32x8xf32>
      %202 = arith.truncf %201 : vector<32x8xf32> to vector<32x8xbf16>
      %c2_94 = arith.constant 2 : index
      %c0_95 = arith.constant 0 : index
      %c0_96 = arith.constant 0 : index
      %203 = vector.load %arg16[%c2_94, %c0_95, %c0_96] : memref<4x32x8xbf16, #tpu.memory_space<vmem>>, vector<1x32x8xbf16>
      %204 = vector.shape_cast %203 : vector<1x32x8xbf16> to vector<32x8xbf16>
      %205 = vector.shape_cast %202 : vector<32x8xbf16> to vector<1x32x8xbf16>
      tpu.vector_store %arg16[%c2_94, %c0_95, %c0_96], %205 {strides = array<i32>} : memref<4x32x8xbf16, #tpu.memory_space<vmem>>, vector<1x32x8xbf16>,
      %206 = vector.extract_strided_slice %180 {offsets = [0, 48], sizes = [32, 8], strides = [1, 1]} : vector<32x64xf32> to vector<32x8xf32>
      %207 = arith.truncf %206 : vector<32x8xf32> to vector<32x8xbf16>
      %c2_97 = arith.constant 2 : index
      %c0_98 = arith.constant 0 : index
      %c0_99 = arith.constant 0 : index
      %208 = vector.load %arg17[%c2_97, %c0_98, %c0_99] : memref<4x32x8xbf16, #tpu.memory_space<vmem>>, vector<1x32x8xbf16>
      %209 = vector.shape_cast %208 : vector<1x32x8xbf16> to vector<32x8xbf16>
      %210 = vector.shape_cast %207 : vector<32x8xbf16> to vector<1x32x8xbf16>
      tpu.vector_store %arg17[%c2_97, %c0_98, %c0_99], %210 {strides = array<i32>} : memref<4x32x8xbf16, #tpu.memory_space<vmem>>, vector<1x32x8xbf16>,
      %211 = vector.extract_strided_slice %180 {offsets = [0, 24], sizes = [32, 8], strides = [1, 1]} : vector<32x64xf32> to vector<32x8xf32>
      %212 = arith.truncf %211 : vector<32x8xf32> to vector<32x8xbf16>
      %c3_100 = arith.constant 3 : index
      %c0_101 = arith.constant 0 : index
      %c0_102 = arith.constant 0 : index
      %213 = vector.load %arg16[%c3_100, %c0_101, %c0_102] : memref<4x32x8xbf16, #tpu.memory_space<vmem>>, vector<1x32x8xbf16>
      %214 = vector.shape_cast %213 : vector<1x32x8xbf16> to vector<32x8xbf16>
      %215 = vector.shape_cast %212 : vector<32x8xbf16> to vector<1x32x8xbf16>
      tpu.vector_store %arg16[%c3_100, %c0_101, %c0_102], %215 {strides = array<i32>} : memref<4x32x8xbf16, #tpu.memory_space<vmem>>, vector<1x32x8xbf16>,
      %216 = vector.extract_strided_slice %180 {offsets = [0, 56], sizes = [32, 8], strides = [1, 1]} : vector<32x64xf32> to vector<32x8xf32>
      %217 = arith.truncf %216 : vector<32x8xf32> to vector<32x8xbf16>
      %c3_103 = arith.constant 3 : index
      %c0_104 = arith.constant 0 : index
      %c0_105 = arith.constant 0 : index
      %218 = vector.load %arg17[%c3_103, %c0_104, %c0_105] : memref<4x32x8xbf16, #tpu.memory_space<vmem>>, vector<1x32x8xbf16>
      %219 = vector.shape_cast %218 : vector<1x32x8xbf16> to vector<32x8xbf16>
      %220 = vector.shape_cast %217 : vector<32x8xbf16> to vector<1x32x8xbf16>
      tpu.vector_store %arg17[%c3_103, %c0_104, %c0_105], %220 {strides = array<i32>} : memref<4x32x8xbf16, #tpu.memory_space<vmem>>, vector<1x32x8xbf16>,
    } else {
    }
    %c0 = arith.constant 0 : index
    %c0_1 = arith.constant 0 : index
    %c0_2 = arith.constant 0 : index
    %3 = vector.load %arg2[%c0, %c0_1, %c0_2] : memref<1x32x32xf32, #tpu.memory_space<vmem>>, vector<1x32x32xf32>
    %4 = vector.shape_cast %3 : vector<1x32x32xf32> to vector<32x32xf32>
    %c0_3 = arith.constant 0 : index
    %c0_4 = arith.constant 0 : index
    %5 = vector.load %arg3[%c0_3, %c0_4] : memref<1x32xf32, #tpu.memory_space<vmem>>, vector<1x32xf32>
    %6 = vector.shape_cast %5 : vector<1x32xf32> to vector<32xf32>
    %c0_5 = arith.constant 0 : index
    %c0_6 = arith.constant 0 : index
    %7 = vector.load %arg4[%c0_5, %c0_6] : memref<1x32xf32, #tpu.memory_space<vmem>>, vector<1x32xf32>
    %8 = vector.shape_cast %7 : vector<1x32xf32> to vector<32xf32>
    %cst = arith.constant dense<0.000000e+00> : vector<32xf32>
    %9 = vector.multi_reduction <add>, %4, %cst [1] : vector<32x32xf32> to vector<32xf32>
    %10 = vector.shape_cast %9 : vector<32xf32> to vector<32x1xf32>
    %cst_7 = arith.constant 3.200000e+01 : f32
    %11 = vector.broadcast %cst_7 : f32 to vector<32x1xf32>
    %12 = arith.divf %10, %11 : vector<32x1xf32>
    %13 = vector.broadcast %12 : vector<32x1xf32> to vector<32x32xf32>
    %14 = arith.subf %4, %13 : vector<32x32xf32>
    %15 = arith.mulf %14, %14 : vector<32x32xf32>
    %cst_8 = arith.constant dense<0.000000e+00> : vector<32xf32>
    %16 = vector.multi_reduction <add>, %15, %cst_8 [1] : vector<32x32xf32> to vector<32xf32>
    %17 = vector.shape_cast %16 : vector<32xf32> to vector<32x1xf32>
    %cst_9 = arith.constant 3.200000e+01 : f32
    %18 = vector.broadcast %cst_9 : f32 to vector<32x1xf32>
    %19 = arith.divf %17, %18 : vector<32x1xf32>
    %20 = vector.broadcast %12 : vector<32x1xf32> to vector<32x32xf32>
    %21 = arith.subf %4, %20 : vector<32x32xf32>
    %cst_10 = arith.constant 9.99999974E-6 : f32
    %22 = vector.broadcast %cst_10 : f32 to vector<32x1xf32>
    %23 = arith.addf %19, %22 : vector<32x1xf32>
    %24 = math.rsqrt %23 : vector<32x1xf32>
    %25 = vector.broadcast %24 : vector<32x1xf32> to vector<32x32xf32>
    %26 = arith.mulf %21, %25 : vector<32x32xf32>
    %27 = vector.shape_cast %6 : vector<32xf32> to vector<1x32xf32>
    %28 = vector.broadcast %27 : vector<1x32xf32> to vector<32x32xf32>
    %29 = arith.mulf %26, %28 : vector<32x32xf32>
    %30 = vector.shape_cast %8 : vector<32xf32> to vector<1x32xf32>
    %31 = vector.broadcast %30 : vector<1x32xf32> to vector<32x32xf32>
    %32 = arith.addf %29, %31 : vector<32x32xf32>
    %33 = arith.truncf %32 : vector<32x32xf32> to vector<32x32xbf16>
    %c0_11 = arith.constant 0 : index
    %c0_12 = arith.constant 0 : index
    %34 = vector.load %arg5[%c0_11, %c0_12] : memref<32x32xbf16, #tpu.memory_space<vmem>>, vector<32x32xbf16>
    %cst_13 = arith.constant dense<0.000000e+00> : vector<32x32xf32>
    %35 = tpu.matmul %33, %34, %cst_13 {dimension_numbers = #tpu.dot_dimension_numbers<[1], [0], [0], [1], [0, 0, 1, 1], [], []>} : vector<32x32xbf16>, vector<32x32xbf16>, vector<32x32xf32> -> vector<32x32xf32>
    %cst_14 = arith.constant 0.353553385 : f32
    %36 = vector.broadcast %cst_14 : f32 to vector<32x32xf32>
    %37 = arith.mulf %35, %36 : vector<32x32xf32>
    %38 = vector.extract_strided_slice %37 {offsets = [0, 0], sizes = [32, 8], strides = [1, 1]} : vector<32x32xf32> to vector<32x8xf32>
    %39 = arith.truncf %38 : vector<32x8xf32> to vector<32x8xbf16>
    %c0_15 = arith.constant 0 : index
    %c0_16 = arith.constant 0 : index
    %c0_17 = arith.constant 0 : index
    %40 = vector.load %arg18[%c0_15, %c0_16, %c0_17] : memref<4x32x8xbf16, #tpu.memory_space<vmem>>, vector<1x32x8xbf16>
    %41 = vector.shape_cast %40 : vector<1x32x8xbf16> to vector<32x8xbf16>
    %42 = vector.shape_cast %39 : vector<32x8xbf16> to vector<1x32x8xbf16>
    tpu.vector_store %arg18[%c0_15, %c0_16, %c0_17], %42 {strides = array<i32>} : memref<4x32x8xbf16, #tpu.memory_space<vmem>>, vector<1x32x8xbf16>,
    %43 = vector.extract_strided_slice %37 {offsets = [0, 8], sizes = [32, 8], strides = [1, 1]} : vector<32x32xf32> to vector<32x8xf32>
    %44 = arith.truncf %43 : vector<32x8xf32> to vector<32x8xbf16>
    %c1 = arith.constant 1 : index
    %c0_18 = arith.constant 0 : index
    %c0_19 = arith.constant 0 : index
    %45 = vector.load %arg18[%c1, %c0_18, %c0_19] : memref<4x32x8xbf16, #tpu.memory_space<vmem>>, vector<1x32x8xbf16>
    %46 = vector.shape_cast %45 : vector<1x32x8xbf16> to vector<32x8xbf16>
    %47 = vector.shape_cast %44 : vector<32x8xbf16> to vector<1x32x8xbf16>
    tpu.vector_store %arg18[%c1, %c0_18, %c0_19], %47 {strides = array<i32>} : memref<4x32x8xbf16, #tpu.memory_space<vmem>>, vector<1x32x8xbf16>,
    %48 = vector.extract_strided_slice %37 {offsets = [0, 16], sizes = [32, 8], strides = [1, 1]} : vector<32x32xf32> to vector<32x8xf32>
    %49 = arith.truncf %48 : vector<32x8xf32> to vector<32x8xbf16>
    %c2 = arith.constant 2 : index
    %c0_20 = arith.constant 0 : index
    %c0_21 = arith.constant 0 : index
    %50 = vector.load %arg18[%c2, %c0_20, %c0_21] : memref<4x32x8xbf16, #tpu.memory_space<vmem>>, vector<1x32x8xbf16>
    %51 = vector.shape_cast %50 : vector<1x32x8xbf16> to vector<32x8xbf16>
    %52 = vector.shape_cast %49 : vector<32x8xbf16> to vector<1x32x8xbf16>
    tpu.vector_store %arg18[%c2, %c0_20, %c0_21], %52 {strides = array<i32>} : memref<4x32x8xbf16, #tpu.memory_space<vmem>>, vector<1x32x8xbf16>,
    %53 = vector.extract_strided_slice %37 {offsets = [0, 24], sizes = [32, 8], strides = [1, 1]} : vector<32x32xf32> to vector<32x8xf32>
    %54 = arith.truncf %53 : vector<32x8xf32> to vector<32x8xbf16>
    %c3 = arith.constant 3 : index
    %c0_22 = arith.constant 0 : index
    %c0_23 = arith.constant 0 : index
    %55 = vector.load %arg18[%c3, %c0_22, %c0_23] : memref<4x32x8xbf16, #tpu.memory_space<vmem>>, vector<1x32x8xbf16>
    %56 = vector.shape_cast %55 : vector<1x32x8xbf16> to vector<32x8xbf16>
    %57 = vector.shape_cast %54 : vector<32x8xbf16> to vector<1x32x8xbf16>
    tpu.vector_store %arg18[%c3, %c0_22, %c0_23], %57 {strides = array<i32>} : memref<4x32x8xbf16, #tpu.memory_space<vmem>>, vector<1x32x8xbf16>,
    %c0_24 = arith.constant 0 : index
    %c0_25 = arith.constant 0 : index
    %c0_26 = arith.constant 0 : index
    %58 = vector.load %arg18[%c0_24, %c0_25, %c0_26] : memref<4x32x8xbf16, #tpu.memory_space<vmem>>, vector<4x32x8xbf16>
    %c0_27 = arith.constant 0 : index
    %c0_28 = arith.constant 0 : index
    %c0_29 = arith.constant 0 : index
    %59 = vector.load %arg16[%c0_27, %c0_28, %c0_29] : memref<4x32x8xbf16, #tpu.memory_space<vmem>>, vector<4x32x8xbf16>
    "tpu.trace_start"() <{level = 10 : i32, message = "htd,hnd->htn"}> : () -> ()
    %cst_30 = arith.constant dense<0.000000e+00> : vector<4x32x32xf32>
    %60 = tpu.matmul %58, %59, %cst_30 {dimension_numbers = #tpu.dot_dimension_numbers<[2], [2], [1], [1], [0, 0, 0, 1, 1, 1], [0], [0]>} : vector<4x32x8xbf16>, vector<4x32x8xbf16>, vector<4x32x32xf32> -> vector<4x32x32xf32>
    "tpu.trace_stop"() : () -> ()
    %cst_31 = arith.constant dense<0xFF800000> : vector<4x32xf32>
    %61 = vector.multi_reduction <maximumf>, %60, %cst_31 [2] : vector<4x32x32xf32> to vector<4x32xf32>
    %62 = vector.shape_cast %61 : vector<4x32xf32> to vector<4x32x1xf32>
    %63 = vector.broadcast %62 : vector<4x32x1xf32> to vector<4x32x32xf32>
    %64 = arith.subf %60, %63 : vector<4x32x32xf32>
    %65 = math.exp %64 : vector<4x32x32xf32>
    %cst_32 = arith.constant dense<0.000000e+00> : vector<4x32xf32>
    %66 = vector.multi_reduction <add>, %65, %cst_32 [2] : vector<4x32x32xf32> to vector<4x32xf32>
    %67 = vector.shape_cast %66 : vector<4x32xf32> to vector<4x32x1xf32>
    %68 = tpu.reciprocal %67 {approx = true} : vector<4x32x1xf32> -> vector<4x32x1xf32>
    %69 = vector.broadcast %68 : vector<4x32x1xf32> to vector<4x32x32xf32>
    %70 = arith.mulf %65, %69 : vector<4x32x32xf32>
    %71 = arith.truncf %70 : vector<4x32x32xf32> to vector<4x32x32xbf16>
    %c0_33 = arith.constant 0 : index
    %c0_34 = arith.constant 0 : index
    %c0_35 = arith.constant 0 : index
    %72 = vector.load %arg17[%c0_33, %c0_34, %c0_35] : memref<4x32x8xbf16, #tpu.memory_space<vmem>>, vector<4x32x8xbf16>
    "tpu.trace_start"() <{level = 10 : i32, message = "htn,hnd->htd"}> : () -> ()
    %cst_36 = arith.constant dense<0.000000e+00> : vector<4x32x8xf32>
    %73 = tpu.matmul %71, %72, %cst_36 {dimension_numbers = #tpu.dot_dimension_numbers<[2], [1], [1], [2], [0, 0, 0, 1, 1, 2], [0], [0]>} : vector<4x32x32xbf16>, vector<4x32x8xbf16>, vector<4x32x8xf32> -> vector<4x32x8xf32>
    "tpu.trace_stop"() : () -> ()
    %74 = vector.extract_strided_slice %73 {offsets = [0, 0, 0], sizes = [1, 32, 8], strides = [1, 1, 1]} : vector<4x32x8xf32> to vector<1x32x8xf32>
    %75 = vector.shape_cast %74 : vector<1x32x8xf32> to vector<32x8xf32>
    %76 = vector.extract_strided_slice %73 {offsets = [1, 0, 0], sizes = [1, 32, 8], strides = [1, 1, 1]} : vector<4x32x8xf32> to vector<1x32x8xf32>
    %77 = vector.shape_cast %76 : vector<1x32x8xf32> to vector<32x8xf32>
    %78 = vector.extract_strided_slice %73 {offsets = [2, 0, 0], sizes = [1, 32, 8], strides = [1, 1, 1]} : vector<4x32x8xf32> to vector<1x32x8xf32>
    %79 = vector.shape_cast %78 : vector<1x32x8xf32> to vector<32x8xf32>
    %80 = vector.extract_strided_slice %73 {offsets = [3, 0, 0], sizes = [1, 32, 8], strides = [1, 1, 1]} : vector<4x32x8xf32> to vector<1x32x8xf32>
    %81 = vector.shape_cast %80 : vector<1x32x8xf32> to vector<32x8xf32>
    %82 = tpu.concatenate %75, %77, %79, %81 in 1 : vector<32x8xf32>, vector<32x8xf32>, vector<32x8xf32>, vector<32x8xf32> -> vector<32x32xf32>
    %83 = arith.truncf %82 : vector<32x32xf32> to vector<32x32xbf16>
    %c0_37 = arith.constant 0 : index
    %c0_38 = arith.constant 0 : index
    %84 = vector.load %arg7[%c0_37, %c0_38] : memref<32x32xbf16, #tpu.memory_space<vmem>>, vector<32x32xbf16>
    %cst_39 = arith.constant dense<0.000000e+00> : vector<32x32xf32>
    %85 = tpu.matmul %83, %84, %cst_39 {dimension_numbers = #tpu.dot_dimension_numbers<[1], [0], [0], [1], [0, 0, 1, 1], [], []>} : vector<32x32xbf16>, vector<32x32xbf16>, vector<32x32xf32> -> vector<32x32xf32>
    %c0_40 = arith.constant 0 : index
    %c0_41 = arith.constant 0 : index
    %86 = vector.load %arg8[%c0_40, %c0_41] : memref<1x32xf32, #tpu.memory_space<vmem>>, vector<1x32xf32>
    %87 = vector.shape_cast %86 : vector<1x32xf32> to vector<32xf32>
    %88 = vector.shape_cast %87 : vector<32xf32> to vector<1x32xf32>
    %89 = vector.broadcast %88 : vector<1x32xf32> to vector<32x32xf32>
    %90 = arith.addf %85, %89 : vector<32x32xf32>
    %91 = arith.addf %4, %90 : vector<32x32xf32>
    %c0_42 = arith.constant 0 : index
    %c0_43 = arith.constant 0 : index
    %92 = vector.load %arg9[%c0_42, %c0_43] : memref<1x32xf32, #tpu.memory_space<vmem>>, vector<1x32xf32>
    %93 = vector.shape_cast %92 : vector<1x32xf32> to vector<32xf32>
    %c0_44 = arith.constant 0 : index
    %c0_45 = arith.constant 0 : index
    %94 = vector.load %arg10[%c0_44, %c0_45] : memref<1x32xf32, #tpu.memory_space<vmem>>, vector<1x32xf32>
    %95 = vector.shape_cast %94 : vector<1x32xf32> to vector<32xf32>
    %cst_46 = arith.constant dense<0.000000e+00> : vector<32xf32>
    %96 = vector.multi_reduction <add>, %91, %cst_46 [1] : vector<32x32xf32> to vector<32xf32>
    %97 = vector.shape_cast %96 : vector<32xf32> to vector<32x1xf32>
    %cst_47 = arith.constant 3.200000e+01 : f32
    %98 = vector.broadcast %cst_47 : f32 to vector<32x1xf32>
    %99 = arith.divf %97, %98 : vector<32x1xf32>
    %100 = vector.broadcast %99 : vector<32x1xf32> to vector<32x32xf32>
    %101 = arith.subf %91, %100 : vector<32x32xf32>
    %102 = arith.mulf %101, %101 : vector<32x32xf32>
    %cst_48 = arith.constant dense<0.000000e+00> : vector<32xf32>
    %103 = vector.multi_reduction <add>, %102, %cst_48 [1] : vector<32x32xf32> to vector<32xf32>
    %104 = vector.shape_cast %103 : vector<32xf32> to vector<32x1xf32>
    %cst_49 = arith.constant 3.200000e+01 : f32
    %105 = vector.broadcast %cst_49 : f32 to vector<32x1xf32>
    %106 = arith.divf %104, %105 : vector<32x1xf32>
    %107 = vector.broadcast %99 : vector<32x1xf32> to vector<32x32xf32>
    %108 = arith.subf %91, %107 : vector<32x32xf32>
    %cst_50 = arith.constant 9.99999974E-6 : f32
    %109 = vector.broadcast %cst_50 : f32 to vector<32x1xf32>
    %110 = arith.addf %106, %109 : vector<32x1xf32>
    %111 = math.rsqrt %110 : vector<32x1xf32>
    %112 = vector.broadcast %111 : vector<32x1xf32> to vector<32x32xf32>
    %113 = arith.mulf %108, %112 : vector<32x32xf32>
    %114 = vector.shape_cast %93 : vector<32xf32> to vector<1x32xf32>
    %115 = vector.broadcast %114 : vector<1x32xf32> to vector<32x32xf32>
    %116 = arith.mulf %113, %115 : vector<32x32xf32>
    %117 = vector.shape_cast %95 : vector<32xf32> to vector<1x32xf32>
    %118 = vector.broadcast %117 : vector<1x32xf32> to vector<32x32xf32>
    %119 = arith.addf %116, %118 : vector<32x32xf32>
    %120 = arith.truncf %119 : vector<32x32xf32> to vector<32x32xbf16>
    %c0_51 = arith.constant 0 : index
    %c0_52 = arith.constant 0 : index
    %121 = vector.load %arg11[%c0_51, %c0_52] : memref<32x128xbf16, #tpu.memory_space<vmem>>, vector<32x128xbf16>
    %cst_53 = arith.constant dense<0.000000e+00> : vector<32x128xf32>
    %122 = tpu.matmul %120, %121, %cst_53 {dimension_numbers = #tpu.dot_dimension_numbers<[1], [0], [0], [1], [0, 0, 1, 1], [], []>} : vector<32x32xbf16>, vector<32x128xbf16>, vector<32x128xf32> -> vector<32x128xf32>
    %c0_54 = arith.constant 0 : index
    %c0_55 = arith.constant 0 : index
    %123 = vector.load %arg12[%c0_54, %c0_55] : memref<1x128xf32, #tpu.memory_space<vmem>>, vector<1x128xf32>
    %124 = vector.shape_cast %123 : vector<1x128xf32> to vector<128xf32>
    %125 = vector.shape_cast %124 : vector<128xf32> to vector<1x128xf32>
    %126 = vector.broadcast %125 : vector<1x128xf32> to vector<32x128xf32>
    %127 = arith.addf %122, %126 : vector<32x128xf32>
    %cst_56 = arith.constant 5.000000e-01 : f32
    %128 = vector.broadcast %cst_56 : f32 to vector<32x128xf32>
    %129 = arith.mulf %128, %127 : vector<32x128xf32>
    %cst_57 = arith.constant 0.707106769 : f32
    %130 = vector.broadcast %cst_57 : f32 to vector<32x128xf32>
    %131 = arith.mulf %127, %130 : vector<32x128xf32>
    %132 = math.erf %131 : vector<32x128xf32>
    %cst_58 = arith.constant 1.000000e+00 : f32
    %133 = vector.broadcast %cst_58 : f32 to vector<32x128xf32>
    %134 = arith.addf %133, %132 : vector<32x128xf32>
    %135 = arith.mulf %129, %134 : vector<32x128xf32>
    %136 = arith.truncf %135 : vector<32x128xf32> to vector<32x128xbf16>
    %c0_59 = arith.constant 0 : index
    %c0_60 = arith.constant 0 : index
    %137 = vector.load %arg13[%c0_59, %c0_60] : memref<128x32xbf16, #tpu.memory_space<vmem>>, vector<128x32xbf16>
    %cst_61 = arith.constant dense<0.000000e+00> : vector<32x32xf32>
    %138 = tpu.matmul %136, %137, %cst_61 {dimension_numbers = #tpu.dot_dimension_numbers<[1], [0], [0], [1], [0, 0, 1, 1], [], []>} : vector<32x128xbf16>, vector<128x32xbf16>, vector<32x32xf32> -> vector<32x32xf32>
    %c0_62 = arith.constant 0 : index
    %c0_63 = arith.constant 0 : index
    %139 = vector.load %arg14[%c0_62, %c0_63] : memref<1x32xf32, #tpu.memory_space<vmem>>, vector<1x32xf32>
    %140 = vector.shape_cast %139 : vector<1x32xf32> to vector<32xf32>
    %141 = vector.shape_cast %140 : vector<32xf32> to vector<1x32xf32>
    %142 = vector.broadcast %141 : vector<1x32xf32> to vector<32x32xf32>
    %143 = arith.addf %138, %142 : vector<32x32xf32>
    %144 = arith.addf %91, %143 : vector<32x32xf32>
    %c0_64 = arith.constant 0 : index
    %c0_65 = arith.constant 0 : index
    %c0_66 = arith.constant 0 : index
    %145 = vector.load %arg15[%c0_64, %c0_65, %c0_66] : memref<1x32x32xf32, #tpu.memory_space<vmem>>, vector<1x32x32xf32>
    %146 = vector.shape_cast %145 : vector<1x32x32xf32> to vector<32x32xf32>
    %147 = vector.shape_cast %144 : vector<32x32xf32> to vector<1x32x32xf32>
    tpu.vector_store %arg15[%c0_64, %c0_65, %c0_66], %147 {strides = array<i32>} : memref<1x32x32xf32, #tpu.memory_space<vmem>>, vector<1x32x32xf32>,
    return
  }
  func.func @transform_0(%arg0: i32, %arg1: i32) -> (i32, i32, i32) {
    %c0_i32 = arith.constant 0 : i32
    %c0_i32_0 = arith.constant 0 : i32
    %c0_i32_1 = arith.constant 0 : i32
    return %arg0, %c0_i32, %c0_i32_0 : i32, i32, i32
  }
  func.func @transform_1(%arg0: i32, %arg1: i32) -> (i32, i32) {
    %c0_i32 = arith.constant 0 : i32
    %c0_i32_0 = arith.constant 0 : i32
    %c0_i32_1 = arith.constant 0 : i32
    return %c0_i32, %c0_i32_0 : i32, i32
  }
  func.func @transform_2(%arg0: i32, %arg1: i32) -> (i32, i32) {
    %c0_i32 = arith.constant 0 : i32
    %c0_i32_0 = arith.constant 0 : i32
    %c0_i32_1 = arith.constant 0 : i32
    return %c0_i32, %c0_i32_0 : i32, i32
  }
  func.func @transform_3(%arg0: i32, %arg1: i32) -> (i32, i32) {
    %c0_i32 = arith.constant 0 : i32
    %c0_i32_0 = arith.constant 0 : i32
    %c0_i32_1 = arith.constant 0 : i32
    return %c0_i32, %c0_i32_0 : i32, i32
  }
  func.func @transform_4(%arg0: i32, %arg1: i32) -> (i32, i32) {
    %c0_i32 = arith.constant 0 : i32
    %c0_i32_0 = arith.constant 0 : i32
    %c0_i32_1 = arith.constant 0 : i32
    return %c0_i32, %c0_i32_0 : i32, i32
  }
  func.func @transform_5(%arg0: i32, %arg1: i32) -> (i32, i32) {
    %c0_i32 = arith.constant 0 : i32
    %c0_i32_0 = arith.constant 0 : i32
    %c0_i32_1 = arith.constant 0 : i32
    return %c0_i32, %c0_i32_0 : i32, i32
  }
  func.func @transform_6(%arg0: i32, %arg1: i32) -> (i32, i32) {
    %c0_i32 = arith.constant 0 : i32
    %c0_i32_0 = arith.constant 0 : i32
    %c0_i32_1 = arith.constant 0 : i32
    return %c0_i32, %c0_i32_0 : i32, i32
  }
  func.func @transform_7(%arg0: i32, %arg1: i32) -> (i32, i32) {
    %c0_i32 = arith.constant 0 : i32
    %c0_i32_0 = arith.constant 0 : i32
    %c0_i32_1 = arith.constant 0 : i32
    return %c0_i32, %c0_i32_0 : i32, i32
  }
  func.func @transform_8(%arg0: i32, %arg1: i32) -> (i32, i32) {
    %c0_i32 = arith.constant 0 : i32
    %c0_i32_0 = arith.constant 0 : i32
    %c0_i32_1 = arith.constant 0 : i32
    return %c0_i32, %c0_i32_0 : i32, i32
  }
  func.func @transform_9(%arg0: i32, %arg1: i32) -> (i32, i32) {
    %c0_i32 = arith.constant 0 : i32
    %c0_i32_0 = arith.constant 0 : i32
    %c0_i32_1 = arith.constant 0 : i32
    return %c0_i32, %c0_i32_0 : i32, i32
  }
  func.func @transform_10(%arg0: i32, %arg1: i32) -> (i32, i32) {
    %c0_i32 = arith.constant 0 : i32
    %c0_i32_0 = arith.constant 0 : i32
    %c0_i32_1 = arith.constant 0 : i32
    return %c0_i32, %c0_i32_0 : i32, i32
  }
  func.func @transform_11(%arg0: i32, %arg1: i32) -> (i32, i32) {
    %c0_i32 = arith.constant 0 : i32
    %c0_i32_0 = arith.constant 0 : i32
    %c0_i32_1 = arith.constant 0 : i32
    return %c0_i32, %c0_i32_0 : i32, i32
  }
  func.func @transform_12(%arg0: i32, %arg1: i32) -> (i32, i32) {
    %c0_i32 = arith.constant 0 : i32
    %c0_i32_0 = arith.constant 0 : i32
    %c0_i32_1 = arith.constant 0 : i32
    return %c0_i32, %c0_i32_0 : i32, i32
  }
  func.func @transform_13(%arg0: i32, %arg1: i32) -> (i32, i32, i32) {
    %c0_i32 = arith.constant 0 : i32
    %c0_i32_0 = arith.constant 0 : i32
    return %arg0, %arg1, %c0_i32 : i32, i32, i32
  }
}

</mosaic_0001>

<llo_original>
// kernel: tpu_custom_call.1
$region0: #{tpu_custom_call.1}
  #allocation0 [shape = 'u32[]', space=smem, size = 0x4, offset = 0x4, fixed_abs, tag = 'smem constant byte address 0x4 - core index']
  #allocation1 [shape = 'u32[72,128]{1,0:T(1,128)}', space=vmem, size = 0x9000, scoped, tag = 'internal scratch']
  #allocation2 [shape = 'bf16[4,32,8]{2,1,0:T(8,128)(2,1)}', space=vmem, size = 0x8000, scoped, tag = 'scratch operand']
  #allocation3 [shape = 'bf16[4,32,8]{2,1,0:T(8,128)(2,1)}', space=vmem, size = 0x8000, scoped, tag = 'scratch operand']
  #allocation4 [shape = 'bf16[4,32,8]{2,1,0:T(8,128)(2,1)}', space=vmem, size = 0x8000, scoped, tag = 'scratch operand']
  %s0 = inlined_call_operand.vmem [shape: f32[2,32,32], index: 0, kind: input, shape index: {}]
  %s1 = inlined_call_operand.hbm [shape: f32[1,32], index: 1, kind: input, shape index: {}]
  %s2 = inlined_call_operand.vmem [shape: f32[1,32], index: 2, kind: input, shape index: {}]
  %s3 = inlined_call_operand.vmem [shape: bf16[32,32], index: 3, kind: input, shape index: {}]
  %s4 = inlined_call_operand.hbm [shape: bf16[32,64], index: 4, kind: input, shape index: {}]
  %s5 = inlined_call_operand.hbm [shape: bf16[32,32], index: 5, kind: input, shape index: {}]
  %s6 = inlined_call_operand.vmem [shape: f32[1,32], index: 6, kind: input, shape index: {}]
  %s7 = inlined_call_operand.vmem [shape: f32[1,32], index: 7, kind: input, shape index: {}]
  %s8 = inlined_call_operand.vmem [shape: f32[1,32], index: 8, kind: input, shape index: {}]
  %s9 = inlined_call_operand.hbm [shape: bf16[32,128], index: 9, kind: input, shape index: {}]
  %s10 = inlined_call_operand.vmem [shape: f32[1,128], index: 10, kind: input, shape index: {}]
  %s11 = inlined_call_operand.vmem [shape: bf16[128,32], index: 11, kind: input, shape index: {}]
  %s12 = inlined_call_operand.vmem [shape: f32[1,32], index: 12, kind: input, shape index: {}]
  %s13 = inlined_call_operand.hbm [shape: f32[2,32,32], index: 13, kind: output, shape index: {}]
  %s14 = sld [smem:[#allocation0]]
  $region105: #{tpu_custom_call.1} parent=0
    _
  %s16 = ssub.s32 1, %s14
  %s17 = scalar_select 0, %s16, %s14
  $region1: #{tpu_custom_call.1} parent=0
    #allocation5 [shape = 'u8[512]{0}', space=vmem, size = 0x400, scoped, tag = 'input window, operand 1, single buffered']
    #allocation6 [shape = 's32[2]{0}', space=sflag, size = 0x8, scoped, tag = 'scoped memory for tpu_custom_call.1']
    #allocation7 [shape = 's32[2]{0}', space=sflag, size = 0x8, scoped, tag = 'scoped memory for tpu_custom_call.1']
    #allocation8 [shape = 'u8[8192]{0}', space=vmem, size = 0x2000, scoped, tag = 'input window, operand 4, single buffered']
    #allocation9 [shape = 's32[1]{0}', space=sflag, size = 0x4, scoped, tag = 'scoped memory for tpu_custom_call.1']
    #allocation10 [shape = 'u8[8192]{0}', space=vmem, size = 0x2000, scoped, tag = 'input window, operand 5, single buffered']
    #allocation11 [shape = 'u8[8192]{0}', space=vmem, size = 0x2000, scoped, tag = 'input window, operand 9, single buffered']
    #allocation12 [shape = 's32[1]{0}', space=sflag, size = 0x4, scoped, tag = 'scoped memory for tpu_custom_call.1']
    #allocation13 [shape = 'u8[32768]{0}', space=vmem, size = 0x8000, scoped, tag = 'output window, operand 0']
    %18 = vsyncpa [#allocation6], 0
    %19 = vsyncpa [#allocation9], 0
    %20 = vsyncpa [#allocation12], 0
    %21 = vsyncpa [#allocation7], 0
    %s22 = scalar_lea.sflag [#allocation7], 1
    %23 = vsyncpa %s22, 0
    loop: start=0, step=1, limit=4
    $region2: #{tpu_custom_call.1} parent=1 // loop_pre_header
      _
    $region3: #{tpu_custom_call.1} parent=1 // loop_header
      %s25 = sphi 0, %s29
      %p26 = scmp.ge.s32.totalorder %s25, 4
      %s32 = sphi 0, %s44
      %s33 = sphi 0, %s40
      %s34 = sphi 0, %s32
      %s35 = sphi 0, %s33
      %s36 = sphi 0, %s34
      %s37 = sphi 0, %s35
      %s47 = sphi 0, %s49
      %s50 = sphi 0, %s47
      %s51 = sphi 0, %s50
      %s67 = sphi 0, %s51
      %s71 = sphi 0, %s71
      %s73 = sphi 0, %s71
      %s74 = sphi 0, %s73
      %s88 = sphi 0, %s74
      %s92 = sphi 0, %s92
      %s94 = sphi 0, %s92
      %s95 = sphi 0, %s94
      %s109 = sphi 0, %s95
      %s113 = sphi 0, %s113
      %s115 = sphi 0, %s113
      %s116 = sphi 0, %s115
      %s130 = sphi 0, %s116
      %s134 = sphi 0, %s134
      %s136 = sphi 0, %s134
      %s137 = sphi 0, %s136
      %s151 = sphi 0, %s137
      %s155 = sphi 0, %s155
      %s157 = sphi 0, %s155
      %s158 = sphi 0, %s157
      %s172 = sphi 0, %s158
      %s176 = sphi 0, %s176
      %s178 = sphi 0, %s176
      %s179 = sphi 0, %s178
      %s193 = sphi 0, %s179
      %s197 = sphi 0, %s197
      %s199 = sphi 0, %s197
      %s200 = sphi 0, %s199
      %s214 = sphi 0, %s200
      %s218 = sphi 0, %s218
      %s220 = sphi 0, %s218
      %s221 = sphi 0, %s220
      %s235 = sphi 0, %s221
      %s239 = sphi 0, %s239
      %s241 = sphi 0, %s239
      %s242 = sphi 0, %s241
      %s256 = sphi 0, %s242
      %s260 = sphi 0, %s260
      %s262 = sphi 0, %s260
      %s263 = sphi 0, %s262
      %s277 = sphi 0, %s263
      %s281 = sphi 0, %s281
      %s283 = sphi 0, %s281
      %s284 = sphi 0, %s283
      %s298 = sphi 0, %s284
      %s302 = sphi 0, %s302
      %s304 = sphi 0, %s302
      %s305 = sphi 0, %s304
      %s319 = sphi 0, %s305
      %s327 = sphi 0, %s329
      %s330 = sphi 0, %s327
      %s331 = sphi 0, %s330
      %s347 = sphi 0, %s331
    $region4: #{tpu_custom_call.1} parent=1 // loop_header_branch
      %28 = sbr.rel (%p26) target = $region8
    $region5: #{tpu_custom_call.1} parent=1 // loop_body
      %s30 = ssub.s32 %s25, 1
      %s31 = ssub.s32 %s25, 2
      %s38 = sadd.s32 1, %s33
      %p39 = scmp.ge.s32.totalorder %s38, 1
      %s40 = scalar_select %p39, 0, %s38
      %s41 = sadd.s32 1, %s32
      %s42 = scalar_select %p39, %s41, %s32
      %p43 = scmp.ge.s32.totalorder %s42, 2
      %s44 = scalar_select %p43, 0, %s42
      %s45 = ssub.s32 %s32, %s44
      %p46 = scmp.eq.s32.totalorder %s45, 0
      %s48 = sadd.s32 %s47, 1
      %s49 = scalar_select %p46, %s47, %s48
      %p52 = pneg %p46
      %p53 = scmp.eq.s32.totalorder %s25, 1
      %p54 = por %p52, %p53
      %p55 = scmp.ne.s32.totalorder %s47, %s50
      %p56 = scmp.eq.s32.totalorder %s25, 0
      %p57 = por %p55, %p56
      %p58 = scmp.ne.s32.totalorder %s47, %s50
      %p59 = scmp.eq.s32.totalorder %s30, 1
      %p60 = por %p58, %p59
      %p61 = scmp.ne.s32.totalorder %s50, %s51
      %p62 = scmp.eq.s32.totalorder %s30, 0
      %p63 = por %p61, %p62
      %p64 = scmp.ne.s32.totalorder %s50, %s51
      %p65 = scmp.eq.s32.totalorder %s31, 1
      %p66 = por %p64, %p65
      %p68 = scmp.ne.s32.totalorder %s51, %s67
      %p69 = scmp.eq.s32.totalorder %s31, 0
      %p70 = por %p68, %p69
      %s72 = sadd.s32 %s71, 1
      %p75 = scmp.eq.s32.totalorder %s25, 1
      %p76 = scmp.ne.s32.totalorder %s71, %s73
      %p77 = scmp.eq.s32.totalorder %s25, 0
      %p78 = por %p76, %p77
      %p79 = scmp.ne.s32.totalorder %s71, %s73
      %p80 = scmp.eq.s32.totalorder %s30, 1
      %p81 = por %p79, %p80
      %p82 = scmp.ne.s32.totalorder %s73, %s74
      %p83 = scmp.eq.s32.totalorder %s30, 0
      %p84 = por %p82, %p83
      %p85 = scmp.ne.s32.totalorder %s73, %s74
      %p86 = scmp.eq.s32.totalorder %s31, 1
      %p87 = por %p85, %p86
      %p89 = scmp.ne.s32.totalorder %s74, %s88
      %p90 = scmp.eq.s32.totalorder %s31, 0
      %p91 = por %p89, %p90
      %s93 = sadd.s32 %s92, 1
      %p96 = scmp.eq.s32.totalorder %s25, 1
      %p97 = scmp.ne.s32.totalorder %s92, %s94
      %p98 = scmp.eq.s32.totalorder %s25, 0
      %p99 = por %p97, %p98
      %p100 = scmp.ne.s32.totalorder %s92, %s94
      %p101 = scmp.eq.s32.totalorder %s30, 1
      %p102 = por %p100, %p101
      %p103 = scmp.ne.s32.totalorder %s94, %s95
      %p104 = scmp.eq.s32.totalorder %s30, 0
      %p105 = por %p103, %p104
      %p106 = scmp.ne.s32.totalorder %s94, %s95
      %p107 = scmp.eq.s32.totalorder %s31, 1
      %p108 = por %p106, %p107
      %p110 = scmp.ne.s32.totalorder %s95, %s109
      %p111 = scmp.eq.s32.totalorder %s31, 0
      %p112 = por %p110, %p111
      %s114 = sadd.s32 %s113, 1
      %p117 = scmp.eq.s32.totalorder %s25, 1
      %p118 = scmp.ne.s32.totalorder %s113, %s115
      %p119 = scmp.eq.s32.totalorder %s25, 0
      %p120 = por %p118, %p119
      %p121 = scmp.ne.s32.totalorder %s113, %s115
      %p122 = scmp.eq.s32.totalorder %s30, 1
      %p123 = por %p121, %p122
      %p124 = scmp.ne.s32.totalorder %s115, %s116
      %p125 = scmp.eq.s32.totalorder %s30, 0
      %p126 = por %p124, %p125
      %p127 = scmp.ne.s32.totalorder %s115, %s116
      %p128 = scmp.eq.s32.totalorder %s31, 1
      %p129 = por %p127, %p128
      %p131 = scmp.ne.s32.totalorder %s116, %s130
      %p132 = scmp.eq.s32.totalorder %s31, 0
      %p133 = por %p131, %p132
      %s135 = sadd.s32 %s134, 1
      %p138 = scmp.eq.s32.totalorder %s25, 1
      %p139 = scmp.ne.s32.totalorder %s134, %s136
      %p140 = scmp.eq.s32.totalorder %s25, 0
      %p141 = por %p139, %p140
      %p142 = scmp.ne.s32.totalorder %s134, %s136
      %p143 = scmp.eq.s32.totalorder %s30, 1
      %p144 = por %p142, %p143
      %p145 = scmp.ne.s32.totalorder %s136, %s137
      %p146 = scmp.eq.s32.totalorder %s30, 0
      %p147 = por %p145, %p146
      %p148 = scmp.ne.s32.totalorder %s136, %s137
      %p149 = scmp.eq.s32.totalorder %s31, 1
      %p150 = por %p148, %p149
      %p152 = scmp.ne.s32.totalorder %s137, %s151
      %p153 = scmp.eq.s32.totalorder %s31, 0
      %p154 = por %p152, %p153
      %s156 = sadd.s32 %s155, 1
      %p159 = scmp.eq.s32.totalorder %s25, 1
      %p160 = scmp.ne.s32.totalorder %s155, %s157
      %p161 = scmp.eq.s32.totalorder %s25, 0
      %p162 = por %p160, %p161
      %p163 = scmp.ne.s32.totalorder %s155, %s157
      %p164 = scmp.eq.s32.totalorder %s30, 1
      %p165 = por %p163, %p164
      %p166 = scmp.ne.s32.totalorder %s157, %s158
      %p167 = scmp.eq.s32.totalorder %s30, 0
      %p168 = por %p166, %p167
      %p169 = scmp.ne.s32.totalorder %s157, %s158
      %p170 = scmp.eq.s32.totalorder %s31, 1
      %p171 = por %p169, %p170
      %p173 = scmp.ne.s32.totalorder %s158, %s172
      %p174 = scmp.eq.s32.totalorder %s31, 0
      %p175 = por %p173, %p174
      %s177 = sadd.s32 %s176, 1
      %p180 = scmp.eq.s32.totalorder %s25, 1
      %p181 = scmp.ne.s32.totalorder %s176, %s178
      %p182 = scmp.eq.s32.totalorder %s25, 0
      %p183 = por %p181, %p182
      %p184 = scmp.ne.s32.totalorder %s176, %s178
      %p185 = scmp.eq.s32.totalorder %s30, 1
      %p186 = por %p184, %p185
      %p187 = scmp.ne.s32.totalorder %s178, %s179
      %p188 = scmp.eq.s32.totalorder %s30, 0
      %p189 = por %p187, %p188
      %p190 = scmp.ne.s32.totalorder %s178, %s179
      %p191 = scmp.eq.s32.totalorder %s31, 1
      %p192 = por %p190, %p191
      %p194 = scmp.ne.s32.totalorder %s179, %s193
      %p195 = scmp.eq.s32.totalorder %s31, 0
      %p196 = por %p194, %p195
      %s198 = sadd.s32 %s197, 1
      %p201 = scmp.eq.s32.totalorder %s25, 1
      %p202 = scmp.ne.s32.totalorder %s197, %s199
      %p203 = scmp.eq.s32.totalorder %s25, 0
      %p204 = por %p202, %p203
      %p205 = scmp.ne.s32.totalorder %s197, %s199
      %p206 = scmp.eq.s32.totalorder %s30, 1
      %p207 = por %p205, %p206
      %p208 = scmp.ne.s32.totalorder %s199, %s200
      %p209 = scmp.eq.s32.totalorder %s30, 0
      %p210 = por %p208, %p209
      %p211 = scmp.ne.s32.totalorder %s199, %s200
      %p212 = scmp.eq.s32.totalorder %s31, 1
      %p213 = por %p211, %p212
      %p215 = scmp.ne.s32.totalorder %s200, %s214
      %p216 = scmp.eq.s32.totalorder %s31, 0
      %p217 = por %p215, %p216
      %s219 = sadd.s32 %s218, 1
      %p222 = scmp.eq.s32.totalorder %s25, 1
      %p223 = scmp.ne.s32.totalorder %s218, %s220
      %p224 = scmp.eq.s32.totalorder %s25, 0
      %p225 = por %p223, %p224
      %p226 = scmp.ne.s32.totalorder %s218, %s220
      %p227 = scmp.eq.s32.totalorder %s30, 1
      %p228 = por %p226, %p227
      %p229 = scmp.ne.s32.totalorder %s220, %s221
      %p230 = scmp.eq.s32.totalorder %s30, 0
      %p231 = por %p229, %p230
      %p232 = scmp.ne.s32.totalorder %s220, %s221
      %p233 = scmp.eq.s32.totalorder %s31, 1
      %p234 = por %p232, %p233
      %p236 = scmp.ne.s32.totalorder %s221, %s235
      %p237 = scmp.eq.s32.totalorder %s31, 0
      %p238 = por %p236, %p237
      %s240 = sadd.s32 %s239, 1
      %p243 = scmp.eq.s32.totalorder %s25, 1
      %p244 = scmp.ne.s32.totalorder %s239, %s241
      %p245 = scmp.eq.s32.totalorder %s25, 0
      %p246 = por %p244, %p245
      %p247 = scmp.ne.s32.totalorder %s239, %s241
      %p248 = scmp.eq.s32.totalorder %s30, 1
      %p249 = por %p247, %p248
      %p250 = scmp.ne.s32.totalorder %s241, %s242
      %p251 = scmp.eq.s32.totalorder %s30, 0
      %p252 = por %p250, %p251
      %p253 = scmp.ne.s32.totalorder %s241, %s242
      %p254 = scmp.eq.s32.totalorder %s31, 1
      %p255 = por %p253, %p254
      %p257 = scmp.ne.s32.totalorder %s242, %s256
      %p258 = scmp.eq.s32.totalorder %s31, 0
      %p259 = por %p257, %p258
      %s261 = sadd.s32 %s260, 1
      %p264 = scmp.eq.s32.totalorder %s25, 1
      %p265 = scmp.ne.s32.totalorder %s260, %s262
      %p266 = scmp.eq.s32.totalorder %s25, 0
      %p267 = por %p265, %p266
      %p268 = scmp.ne.s32.totalorder %s260, %s262
      %p269 = scmp.eq.s32.totalorder %s30, 1
      %p270 = por %p268, %p269
      %p271 = scmp.ne.s32.totalorder %s262, %s263
      %p272 = scmp.eq.s32.totalorder %s30, 0
      %p273 = por %p271, %p272
      %p274 = scmp.ne.s32.totalorder %s262, %s263
      %p275 = scmp.eq.s32.totalorder %s31, 1
      %p276 = por %p274, %p275
      %p278 = scmp.ne.s32.totalorder %s263, %s277
      %p279 = scmp.eq.s32.totalorder %s31, 0
      %p280 = por %p278, %p279
      %s282 = sadd.s32 %s281, 1
      %p285 = scmp.eq.s32.totalorder %s25, 1
      %p286 = scmp.ne.s32.totalorder %s281, %s283
      %p287 = scmp.eq.s32.totalorder %s25, 0
      %p288 = por %p286, %p287
      %p289 = scmp.ne.s32.totalorder %s281, %s283
      %p290 = scmp.eq.s32.totalorder %s30, 1
      %p291 = por %p289, %p290
      %p292 = scmp.ne.s32.totalorder %s283, %s284
      %p293 = scmp.eq.s32.totalorder %s30, 0
      %p294 = por %p292, %p293
      %p295 = scmp.ne.s32.totalorder %s283, %s284
      %p296 = scmp.eq.s32.totalorder %s31, 1
      %p297 = por %p295, %p296
      %p299 = scmp.ne.s32.totalorder %s284, %s298
      %p300 = scmp.eq.s32.totalorder %s31, 0
      %p301 = por %p299, %p300
      %s303 = sadd.s32 %s302, 1
      %p306 = scmp.eq.s32.totalorder %s25, 1
      %p307 = scmp.ne.s32.totalorder %s302, %s304
      %p308 = scmp.eq.s32.totalorder %s25, 0
      %p309 = por %p307, %p308
      %p310 = scmp.ne.s32.totalorder %s302, %s304
      %p311 = scmp.eq.s32.totalorder %s30, 1
      %p312 = por %p310, %p311
      %p313 = scmp.ne.s32.totalorder %s304, %s305
      %p314 = scmp.eq.s32.totalorder %s30, 0
      %p315 = por %p313, %p314
      %p316 = scmp.ne.s32.totalorder %s304, %s305
      %p317 = scmp.eq.s32.totalorder %s31, 1
      %p318 = por %p316, %p317
      %p320 = scmp.ne.s32.totalorder %s305, %s319
      %p321 = scmp.eq.s32.totalorder %s31, 0
      %p322 = por %p320, %p321
      %s323 = ssub.s32 %s32, %s44
      %s324 = ssub.s32 %s33, %s40
      %s325 = sor.u32 %s323, %s324
      %p326 = scmp.eq.s32.totalorder %s325, 0
      %s328 = sadd.s32 %s327, 1
      %s329 = scalar_select %p326, %s327, %s328
      %p332 = pneg %p326
      %p333 = scmp.eq.s32.totalorder %s25, 1
      %p334 = por %p332, %p333
      %p335 = scmp.ne.s32.totalorder %s327, %s330
      %p336 = scmp.eq.s32.totalorder %s25, 0
      %p337 = por %p335, %p336
      %p338 = scmp.ne.s32.totalorder %s327, %s330
      %p339 = scmp.eq.s32.totalorder %s30, 1
      %p340 = por %p338, %p339
      %p341 = scmp.ne.s32.totalorder %s330, %s331
      %p342 = scmp.eq.s32.totalorder %s30, 0
      %p343 = por %p341, %p342
      %p344 = scmp.ne.s32.totalorder %s330, %s331
      %p345 = scmp.eq.s32.totalorder %s31, 1
      %p346 = por %p344, %p345
      %p348 = scmp.ne.s32.totalorder %s331, %s347
      %p349 = scmp.eq.s32.totalorder %s31, 0
      %p350 = por %p348, %p349
      %p351 = scmp.le.s32.totalorder 1, %s25
      %p352 = scmp.lt.s32.totalorder %s25, 3
      %p353 = pnand %p351, %p352
      %p354 = pneg %p353
      // Predicated region
      $region9: #{tpu_custom_call.1} parent=5 // pred_check
        _
      $region10: #{tpu_custom_call.1} parent=5 // pred_check_branch
        %356 = sbr.rel (%p353) target = $region12
      $region11: #{tpu_custom_call.1} parent=5 // pred_region
        %s357 = ssub.s32 %s25, 1
        // Predicated region
        $region13: #{tpu_custom_call.1} parent=11 // pred_check
          %p358 = pneg %p84
        $region14: #{tpu_custom_call.1} parent=11 // pred_check_branch
          %360 = sbr.rel (%p358) target = $region16
        $region15: #{tpu_custom_call.1} parent=11 // pred_region
          %362 = vsyncadd [#allocation6], 0
          %s364 = sshll.u32 %s1, 4
          %s365 = int_to_ptr.hbm [resolvable:$true] %s364
          %s366 = sshll.u32 [#allocation5], 4
          %s367 = int_to_ptr.vmem [resolvable:$true] %s366
          %369 = dma.hbm_to_vmem [thread:$0]  %s365, 16, %s367, [#allocation6]
        $region16: #{tpu_custom_call.1} parent=11 // pred_fallthru
          _
        // Predicated region
        $region17: #{tpu_custom_call.1} parent=11 // pred_check
          %p370 = pneg %p105
        $region18: #{tpu_custom_call.1} parent=11 // pred_check_branch
          %372 = sbr.rel (%p370) target = $region20
        $region19: #{tpu_custom_call.1} parent=11 // pred_region
          _
        $region20: #{tpu_custom_call.1} parent=11 // pred_fallthru
          _
        // Predicated region
        $region21: #{tpu_custom_call.1} parent=11 // pred_check
          %p373 = pneg %p126
        $region22: #{tpu_custom_call.1} parent=11 // pred_check_branch
          %375 = sbr.rel (%p373) target = $region24
        $region23: #{tpu_custom_call.1} parent=11 // pred_region
          _
        $region24: #{tpu_custom_call.1} parent=11 // pred_fallthru
          _
        // Predicated region
        $region25: #{tpu_custom_call.1} parent=11 // pred_check
          %p376 = pneg %p147
        $region26: #{tpu_custom_call.1} parent=11 // pred_check_branch
          %378 = sbr.rel (%p376) target = $region28
        $region27: #{tpu_custom_call.1} parent=11 // pred_region
          %380 = vsyncadd [#allocation9], 0
          %s381 = sshll.u32 %s4, 4
          %s382 = int_to_ptr.hbm [resolvable:$true] %s381
          %s383 = sshll.u32 [#allocation8], 4
          %s384 = int_to_ptr.vmem [resolvable:$true] %s383
          %389 = dma.hbm_to_vmem [thread:$0]  %s382, 256, %s384, [#allocation9], 64, 64, 4
        $region28: #{tpu_custom_call.1} parent=11 // pred_fallthru
          _
        // Predicated region
        $region29: #{tpu_custom_call.1} parent=11 // pred_check
          %p390 = pneg %p168
        $region30: #{tpu_custom_call.1} parent=11 // pred_check_branch
          %392 = sbr.rel (%p390) target = $region32
        $region31: #{tpu_custom_call.1} parent=11 // pred_region
          %394 = vsyncadd [#allocation9], 0
          %s395 = sshll.u32 %s5, 4
          %s396 = int_to_ptr.hbm [resolvable:$true] %s395
          %s397 = sshll.u32 [#allocation10], 4
          %s398 = int_to_ptr.vmem [resolvable:$true] %s397
          %403 = dma.hbm_to_vmem [thread:$0]  %s396, 256, %s398, [#allocation9], 64, 64, 4
        $region32: #{tpu_custom_call.1} parent=11 // pred_fallthru
          _
        // Predicated region
        $region33: #{tpu_custom_call.1} parent=11 // pred_check
          %p404 = pneg %p189
        $region34: #{tpu_custom_call.1} parent=11 // pred_check_branch
          %406 = sbr.rel (%p404) target = $region36
        $region35: #{tpu_custom_call.1} parent=11 // pred_region
          _
        $region36: #{tpu_custom_call.1} parent=11 // pred_fallthru
          _
        // Predicated region
        $region37: #{tpu_custom_call.1} parent=11 // pred_check
          %p407 = pneg %p210
        $region38: #{tpu_custom_call.1} parent=11 // pred_check_branch
          %409 = sbr.rel (%p407) target = $region40
        $region39: #{tpu_custom_call.1} parent=11 // pred_region
          _
        $region40: #{tpu_custom_call.1} parent=11 // pred_fallthru
          _
        // Predicated region
        $region41: #{tpu_custom_call.1} parent=11 // pred_check
          %p410 = pneg %p231
        $region42: #{tpu_custom_call.1} parent=11 // pred_check_branch
          %412 = sbr.rel (%p410) target = $region44
        $region43: #{tpu_custom_call.1} parent=11 // pred_region
          _
        $region44: #{tpu_custom_call.1} parent=11 // pred_fallthru
          _
        // Predicated region
        $region45: #{tpu_custom_call.1} parent=11 // pred_check
          %p413 = pneg %p252
        $region46: #{tpu_custom_call.1} parent=11 // pred_check_branch
          %415 = sbr.rel (%p413) target = $region48
        $region47: #{tpu_custom_call.1} parent=11 // pred_region
          %417 = vsyncadd [#allocation12], 0
          %s418 = sshll.u32 %s9, 4
          %s419 = int_to_ptr.hbm [resolvable:$true] %s418
          %s420 = sshll.u32 [#allocation11], 4
          %s421 = int_to_ptr.vmem [resolvable:$true] %s420
          %426 = dma.hbm_to_vmem [thread:$0]  %s419, 256, %s421, [#allocation12], 64, 64, 4
        $region48: #{tpu_custom_call.1} parent=11 // pred_fallthru
          _
        // Predicated region
        $region49: #{tpu_custom_call.1} parent=11 // pred_check
          %p427 = pneg %p273
        $region50: #{tpu_custom_call.1} parent=11 // pred_check_branch
          %429 = sbr.rel (%p427) target = $region52
        $region51: #{tpu_custom_call.1} parent=11 // pred_region
          _
        $region52: #{tpu_custom_call.1} parent=11 // pred_fallthru
          _
        // Predicated region
        $region53: #{tpu_custom_call.1} parent=11 // pred_check
          %p430 = pneg %p294
        $region54: #{tpu_custom_call.1} parent=11 // pred_check_branch
          %432 = sbr.rel (%p430) target = $region56
        $region55: #{tpu_custom_call.1} parent=11 // pred_region
          _
        $region56: #{tpu_custom_call.1} parent=11 // pred_fallthru
          _
        // Predicated region
        $region57: #{tpu_custom_call.1} parent=11 // pred_check
          %p433 = pneg %p315
        $region58: #{tpu_custom_call.1} parent=11 // pred_check_branch
          %435 = sbr.rel (%p433) target = $region60
        $region59: #{tpu_custom_call.1} parent=11 // pred_region
          _
        $region60: #{tpu_custom_call.1} parent=11 // pred_fallthru
          _
      $region12: #{tpu_custom_call.1} parent=5 // pred_fallthru
        _
      %p436 = scmp.lt.s32.totalorder %s25, 2
      // Predicated region
      $region61: #{tpu_custom_call.1} parent=5 // pred_check
        %p437 = pneg %p436
      $region62: #{tpu_custom_call.1} parent=5 // pred_check_branch
        %439 = sbr.rel (%p437) target = $region64
      $region63: #{tpu_custom_call.1} parent=5 // pred_region
        // Predicated region
        $region65: #{tpu_custom_call.1} parent=63 // pred_check
          %p440 = pneg %p57
        $region66: #{tpu_custom_call.1} parent=63 // pred_check_branch
          %442 = sbr.rel (%p440) target = $region68
        $region67: #{tpu_custom_call.1} parent=63 // pred_region
          %p443 = scmp.lt.s32.totalorder %s32, 1
          %s444 = scalar_select %p443, %s32, 1
          %s445 = smul.addr %s444, 4
          %s446 = smul.addr %s445, 8
          %s447 = scalar_lea.vmem %s0, %s446
        $region68: #{tpu_custom_call.1} parent=63 // pred_fallthru
          _
      $region64: #{tpu_custom_call.1} parent=5 // pred_fallthru
        _
      %p448 = scmp.le.s32.totalorder 1, %s25
      %p449 = scmp.lt.s32.totalorder %s25, 3
      %p450 = pnand %p448, %p449
      %p451 = pneg %p450
      // Predicated region
      $region69: #{tpu_custom_call.1} parent=5 // pred_check
        _
      $region70: #{tpu_custom_call.1} parent=5 // pred_check_branch
        %453 = sbr.rel (%p450) target = $region72
      $region71: #{tpu_custom_call.1} parent=5 // pred_region
        %s454 = ssub.s32 %s25, 1
        // Predicated region
        $region73: #{tpu_custom_call.1} parent=71 // pred_check
          %p455 = pneg %p84
        $region74: #{tpu_custom_call.1} parent=71 // pred_check_branch
          %457 = sbr.rel (%p455) target = $region76
        $region75: #{tpu_custom_call.1} parent=71 // pred_region
          %459 = dma.done [#allocation6], 16
        $region76: #{tpu_custom_call.1} parent=71 // pred_fallthru
          _
        // Predicated region
        $region77: #{tpu_custom_call.1} parent=71 // pred_check
          %p460 = pneg %p147
        $region78: #{tpu_custom_call.1} parent=71 // pred_check_branch
          %462 = sbr.rel (%p460) target = $region80
        $region79: #{tpu_custom_call.1} parent=71 // pred_region
          %464 = dma.done [#allocation9], 256
        $region80: #{tpu_custom_call.1} parent=71 // pred_fallthru
          _
        // Predicated region
        $region81: #{tpu_custom_call.1} parent=71 // pred_check
          %p465 = pneg %p168
        $region82: #{tpu_custom_call.1} parent=71 // pred_check_branch
          %467 = sbr.rel (%p465) target = $region84
        $region83: #{tpu_custom_call.1} parent=71 // pred_region
          %469 = dma.done [#allocation9], 256
        $region84: #{tpu_custom_call.1} parent=71 // pred_fallthru
          _
        // Predicated region
        $region85: #{tpu_custom_call.1} parent=71 // pred_check
          %p470 = pneg %p252
        $region86: #{tpu_custom_call.1} parent=71 // pred_check_branch
          %472 = sbr.rel (%p470) target = $region88
        $region87: #{tpu_custom_call.1} parent=71 // pred_region
          %474 = dma.done [#allocation12], 256
        $region88: #{tpu_custom_call.1} parent=71 // pred_fallthru
          _
        %p475 = scmp.lt.s32.totalorder %s34, 1
        %s476 = scalar_select %p475, %s34, 1
        %s477 = smul.addr %s476, 4
        %s478 = smul.addr %s477, 8
        %s479 = scalar_lea.vmem %s0, %s478
        %p480 = pneg %p63
        %p481 = pneg %p60
        %p482 = pneg %p84
        %p483 = pneg %p81
        %p484 = pneg %p105
        %p485 = pneg %p102
        %p486 = pneg %p126
        %p487 = pneg %p123
        %p488 = pneg %p147
        %p489 = pneg %p144
        %p490 = pneg %p168
        %p491 = pneg %p165
        %p492 = pneg %p189
        %p493 = pneg %p186
        %p494 = pneg %p210
        %p495 = pneg %p207
        %p496 = pneg %p231
        %p497 = pneg %p228
        %p498 = pneg %p252
        %p499 = pneg %p249
        %p500 = pneg %p273
        %p501 = pneg %p270
        %p502 = pneg %p294
        %p503 = pneg %p291
        %p504 = pneg %p315
        %p505 = pneg %p312
        %p506 = pneg %p343
        %p507 = pneg %p340
        %s508 = sand.u32 %s330, 1
        %s509 = scalar_lea.sflag [#allocation7], %s508
        %s510 = sand.u32 %s330, 1
        %s511 = smul.addr %s510, 32
        %s512 = scalar_lea.vmem [#allocation13], %s511
        %p513 = scmp.lt.s32.totalorder %s34, 1
        %s514 = scalar_select %p513, %s34, 1
        %s515 = smul.addr %s514, 4
        %s516 = smul.addr %s515, 8
        %s517 = scalar_lea.vmem %s0, %s516
        %s518 = smul.u32 4, %s35
        %p520 = scmp.eq.s32.totalorder %s35, 0
        // Predicated region
        $region89: #{tpu_custom_call.1} parent=71 // pred_check
          %p521 = pneg %p520
        $region90: #{tpu_custom_call.1} parent=71 // pred_check_branch
          %523 = sbr.rel (%p521) target = $region92
        $region91: #{tpu_custom_call.1} parent=71 // pred_region
          %v524 = vld [vmem:[%s517] sm:$0xff]
          %v525 = vld [vmem:[%s517 + $0x8] sm:$0xff]
          %v526 = vld [vmem:[%s517 + $0x10] sm:$0xff]
          %v527 = vld [vmem:[%s517 + $0x18] sm:$0xff]
          %v528 = vld [vmem:[#allocation5] sm:$0x1]
          %v529 = vld [vmem:[%s2] sm:$0x1]
          %vm530 = vcmask 261120
          %v531 = vsel %vm530, %v524, 0.0
          %532 = vadd.xlane.f32.xlu0 %v531
          %v533 = vpop.xlane.xlu0 %532
          %v534 = vsel %vm530, %v525, 0.0
          %535 = vadd.xlane.f32.xlu0 %v534
          %v536 = vpop.xlane.xlu0 %535
          %v537 = vsel %vm530, %v526, 0.0
          %538 = vadd.xlane.f32.xlu0 %v537
          %v539 = vpop.xlane.xlu0 %538
          %v540 = vsel %vm530, %v527, 0.0
          %541 = vadd.xlane.f32.xlu0 %v540
          %v542 = vpop.xlane.xlu0 %541
          %v543 = vrcp.pop 32.0
          %v544 = vmul.f32 32.0, %v543
          %v545 = vsub.f32 1.0, %v544
          %v546 = vmul.f32 %v543, %v545
          %v547 = vadd.f32 %v543, %v546
          %vm548 = vweird.f32 %v543
          %v549 = vsel %vm548, %v543, %v547
          %v550 = vmul.f32 %v533, %v549
          %v551 = vmul.f32 %v536, %v549
          %v552 = vmul.f32 %v539, %v549
          %v553 = vmul.f32 %v542, %v549
          %v554 = vsub.f32 %v524, %v550
          %v555 = vsub.f32 %v525, %v551
          %v556 = vsub.f32 %v526, %v552
          %v557 = vsub.f32 %v527, %v553
          %v558 = vmul.f32 %v554, %v554
          %v559 = vmul.f32 %v555, %v555
          %v560 = vmul.f32 %v556, %v556
          %v561 = vmul.f32 %v557, %v557
          %v562 = vsel %vm530, %v558, 0.0
          %563 = vadd.xlane.f32.xlu0 %v562
          %v564 = vpop.xlane.xlu0 %563
          %v565 = vsel %vm530, %v559, 0.0
          %566 = vadd.xlane.f32.xlu0 %v565
          %v567 = vpop.xlane.xlu0 %566
          %v568 = vsel %vm530, %v560, 0.0
          %569 = vadd.xlane.f32.xlu0 %v568
          %v570 = vpop.xlane.xlu0 %569
          %v571 = vsel %vm530, %v561, 0.0
          %572 = vadd.xlane.f32.xlu0 %v571
          %v573 = vpop.xlane.xlu0 %572
          %v574 = vmul.f32 %v564, %v549
          %v575 = vmul.f32 %v567, %v549
          %v576 = vmul.f32 %v570, %v549
          %v577 = vmul.f32 %v573, %v549
          %v578 = vadd.f32 %v574, 1e-05
          %v579 = vadd.f32 %v575, 1e-05
          %v580 = vadd.f32 %v576, 1e-05
          %v581 = vadd.f32 %v577, 1e-05
          %v582 = vrsqrt.pop %v578
          %v583 = vmul.f32 %v582, %v578
          %v584 = vmul.f32 %v583, %v582
          %v585 = vmul.f32 0.5, %v584
          %v586 = vsub.f32 1.5, %v585
          %v587 = vmul.f32 %v582, %v586
          %vm588 = vweird.f32 %v578
          %vm589 = vweird.f32 %v582
          %vm590 = vmor %vm588, %vm589
          %v591 = vsel %vm590, %v582, %v587
          %v592 = vrsqrt.pop %v579
          %v593 = vmul.f32 %v592, %v579
          %v594 = vmul.f32 %v593, %v592
          %v595 = vmul.f32 0.5, %v594
          %v596 = vsub.f32 1.5, %v595
          %v597 = vmul.f32 %v592, %v596
          %vm598 = vweird.f32 %v579
          %vm599 = vweird.f32 %v592
          %vm600 = vmor %vm598, %vm599
          %v601 = vsel %vm600, %v592, %v597
          %v602 = vrsqrt.pop %v580
          %v603 = vmul.f32 %v602, %v580
          %v604 = vmul.f32 %v603, %v602
          %v605 = vmul.f32 0.5, %v604
          %v606 = vsub.f32 1.5, %v605
          %v607 = vmul.f32 %v602, %v606
          %vm608 = vweird.f32 %v580
          %vm609 = vweird.f32 %v602
          %vm610 = vmor %vm608, %vm609
          %v611 = vsel %vm610, %v602, %v607
          %v612 = vrsqrt.pop %v581
          %v613 = vmul.f32 %v612, %v581
          %v614 = vmul.f32 %v613, %v612
          %v615 = vmul.f32 0.5, %v614
          %v616 = vsub.f32 1.5, %v615
          %v617 = vmul.f32 %v612, %v616
          %vm618 = vweird.f32 %v581
          %vm619 = vweird.f32 %v612
          %vm620 = vmor %vm618, %vm619
          %v621 = vsel %vm620, %v612, %v617
          %v622 = vmul.f32 %v554, %v591
          %v623 = vmul.f32 %v555, %v601
          %v624 = vmul.f32 %v556, %v611
          %v625 = vmul.f32 %v557, %v621
          %v627 = vperm.slane %v528, 0
          %v629 = vmul.f32 %v622, %v627
          %v630 = vmul.f32 %v623, %v627
          %v631 = vmul.f32 %v624, %v627
          %v632 = vmul.f32 %v625, %v627
          %v634 = vperm.slane %v529, 0
          %v636 = vadd.f32 %v629, %v634
          %v637 = vadd.f32 %v630, %v634
          %v638 = vadd.f32 %v631, %v634
          %v639 = vadd.f32 %v632, %v634
          %v640 = vpack.c.bf16 %v637, %v636
          %v641 = vpack.c.bf16 %v639, %v638
          %v642 = vld [vmem:[#allocation8] sm:$0xf]
          %v643 = vld [vmem:[#allocation8 + $0x4] sm:$0xf]
          %v644 = vld [vmem:[#allocation8 + $0x8] sm:$0xf]
          %v645 = vld [vmem:[#allocation8 + $0xc] sm:$0xf]
          %v650 = vunpack.c.l.b16 %v642
          %v651 = vunpack.c.l.b16 %v643
          %v652 = vunpack.c.l.b16 %v644
          %v653 = vunpack.c.l.b16 %v645
          %v654 = vpack.c.b16 %v651, %v650
          %v655 = vpack.c.b16 %v653, %v652
          %v659 = vsel %vm530, %v640, 0
          %v662 = vsel %vm530, %v641, 0
          %664 = vmatpush.bf16.msra.mxu0 0
          %665 = vmatpush.bf16.msra.mxu0 0
          %666 = vmatpush.bf16.msra.mxu0 0
          %667 = vmatpush.bf16.msra.mxu0 0
          %668 = vmatpush.bf16.msra.mxu0 0
          %669 = vmatpush.bf16.msra.mxu0 0
          %670 = vmatpush.bf16.msra.mxu0 %v655
          %671 = vmatpush.bf16.msra.mxu0 %v654
          %672 = vmatmul.bf16.gmra.mxu0 %v659
          %v673 = vpop.f32.mrf.mxu0
          %v674 = vadd.f32 0.0, %v673
          %v675 = vpop.f32.mrf.mxu0
          %v676 = vadd.f32 0.0, %v675
          %677 = vmatmul.bf16.gmra.mxu0 %v662
          %v678 = vpop.f32.mrf.mxu0
          %v679 = vadd.f32 0.0, %v678
          %v680 = vpop.f32.mrf.mxu0
          %v681 = vadd.f32 0.0, %v680
          %682 = vdwg.mxu0
          %v683 = vpack.c.bf16 %v674, %v674
          %v684 = vpack.c.bf16 %v676, %v676
          %v685 = vpack.c.bf16 %v679, %v679
          %v686 = vpack.c.bf16 %v681, %v681
          %vm687 = vcmask 60416
          %688 = vst.msk [vmem:[#allocation2] sm:$0xf] %vm687, %v683
          %689 = vst.msk [vmem:[#allocation2 + $0x4] sm:$0xf] %vm687, %v684
          %690 = vst.msk [vmem:[#allocation2 + $0x8] sm:$0xf] %vm687, %v685
          %691 = vst.msk [vmem:[#allocation2 + $0xc] sm:$0xf] %vm687, %v686
          %696 = vrot.lane.b32.xlu0 %v683, 96
          %v697 = vpop.permute.xlu0 %696
          %698 = vrot.lane.b32.xlu0 %v684, 96
          %v699 = vpop.permute.xlu0 %698
          %700 = vrot.lane.b32.xlu0 %v685, 96
          %v701 = vpop.permute.xlu0 %700
          %702 = vrot.lane.b32.xlu0 %v686, 96
          %v703 = vpop.permute.xlu0 %702
          %708 = vst.msk [vmem:[#allocation3] sm:$0xf] %vm687, %v697
          %709 = vst.msk [vmem:[#allocation3 + $0x4] sm:$0xf] %vm687, %v699
          %710 = vst.msk [vmem:[#allocation3 + $0x8] sm:$0xf] %vm687, %v701
          %711 = vst.msk [vmem:[#allocation3 + $0xc] sm:$0xf] %vm687, %v703
          %712 = vrot.lane.b32.xlu0 %v683, 120
          %v713 = vpop.permute.xlu0 %712
          %714 = vrot.lane.b32.xlu0 %v684, 120
          %v715 = vpop.permute.xlu0 %714
          %716 = vrot.lane.b32.xlu0 %v685, 120
          %v717 = vpop.permute.xlu0 %716
          %718 = vrot.lane.b32.xlu0 %v686, 120
          %v719 = vpop.permute.xlu0 %718
          %s724 = scalar_lea.vmem [#allocation2], 16
          %725 = vst.msk [vmem:[%s724] sm:$0xf] %vm687, %v713
          %726 = vst.msk [vmem:[%s724 + $0x4] sm:$0xf] %vm687, %v715
          %727 = vst.msk [vmem:[%s724 + $0x8] sm:$0xf] %vm687, %v717
          %728 = vst.msk [vmem:[%s724 + $0xc] sm:$0xf] %vm687, %v719
          %729 = vrot.lane.b32.xlu0 %v683, 88
          %v730 = vpop.permute.xlu0 %729
          %731 = vrot.lane.b32.xlu0 %v684, 88
          %v732 = vpop.permute.xlu0 %731
          %733 = vrot.lane.b32.xlu0 %v685, 88
          %v734 = vpop.permute.xlu0 %733
          %735 = vrot.lane.b32.xlu0 %v686, 88
          %v736 = vpop.permute.xlu0 %735
          %s741 = scalar_lea.vmem [#allocation3], 16
          %742 = vst.msk [vmem:[%s741] sm:$0xf] %vm687, %v730
          %743 = vst.msk [vmem:[%s741 + $0x4] sm:$0xf] %vm687, %v732
          %744 = vst.msk [vmem:[%s741 + $0x8] sm:$0xf] %vm687, %v734
          %745 = vst.msk [vmem:[%s741 + $0xc] sm:$0xf] %vm687, %v736
          %746 = vrot.lane.b32.xlu0 %v683, 112
          %v747 = vpop.permute.xlu0 %746
          %748 = vrot.lane.b32.xlu0 %v684, 112
          %v749 = vpop.permute.xlu0 %748
          %750 = vrot.lane.b32.xlu0 %v685, 112
          %v751 = vpop.permute.xlu0 %750
          %752 = vrot.lane.b32.xlu0 %v686, 112
          %v753 = vpop.permute.xlu0 %752
          %s758 = scalar_lea.vmem [#allocation2], 32
          %759 = vst.msk [vmem:[%s758] sm:$0xf] %vm687, %v747
          %760 = vst.msk [vmem:[%s758 + $0x4] sm:$0xf] %vm687, %v749
          %761 = vst.msk [vmem:[%s758 + $0x8] sm:$0xf] %vm687, %v751
          %762 = vst.msk [vmem:[%s758 + $0xc] sm:$0xf] %vm687, %v753
          %763 = vrot.lane.b32.xlu0 %v683, 80
          %v764 = vpop.permute.xlu0 %763
          %765 = vrot.lane.b32.xlu0 %v684, 80
          %v766 = vpop.permute.xlu0 %765
          %767 = vrot.lane.b32.xlu0 %v685, 80
          %v768 = vpop.permute.xlu0 %767
          %769 = vrot.lane.b32.xlu0 %v686, 80
          %v770 = vpop.permute.xlu0 %769
          %s775 = scalar_lea.vmem [#allocation3], 32
          %776 = vst.msk [vmem:[%s775] sm:$0xf] %vm687, %v764
          %777 = vst.msk [vmem:[%s775 + $0x4] sm:$0xf] %vm687, %v766
          %778 = vst.msk [vmem:[%s775 + $0x8] sm:$0xf] %vm687, %v768
          %779 = vst.msk [vmem:[%s775 + $0xc] sm:$0xf] %vm687, %v770
          %780 = vrot.lane.b32.xlu0 %v683, 104
          %v781 = vpop.permute.xlu0 %780
          %782 = vrot.lane.b32.xlu0 %v684, 104
          %v783 = vpop.permute.xlu0 %782
          %784 = vrot.lane.b32.xlu0 %v685, 104
          %v785 = vpop.permute.xlu0 %784
          %786 = vrot.lane.b32.xlu0 %v686, 104
          %v787 = vpop.permute.xlu0 %786
          %s792 = scalar_lea.vmem [#allocation2], 48
          %793 = vst.msk [vmem:[%s792] sm:$0xf] %vm687, %v781
          %794 = vst.msk [vmem:[%s792 + $0x4] sm:$0xf] %vm687, %v783
          %795 = vst.msk [vmem:[%s792 + $0x8] sm:$0xf] %vm687, %v785
          %796 = vst.msk [vmem:[%s792 + $0xc] sm:$0xf] %vm687, %v787
          %797 = vrot.lane.b32.xlu0 %v683, 72
          %v798 = vpop.permute.xlu0 %797
          %799 = vrot.lane.b32.xlu0 %v684, 72
          %v800 = vpop.permute.xlu0 %799
          %801 = vrot.lane.b32.xlu0 %v685, 72
          %v802 = vpop.permute.xlu0 %801
          %803 = vrot.lane.b32.xlu0 %v686, 72
          %v804 = vpop.permute.xlu0 %803
          %s809 = scalar_lea.vmem [#allocation3], 48
          %810 = vst.msk [vmem:[%s809] sm:$0xf] %vm687, %v798
          %811 = vst.msk [vmem:[%s809 + $0x4] sm:$0xf] %vm687, %v800
          %812 = vst.msk [vmem:[%s809 + $0x8] sm:$0xf] %vm687, %v802
          %813 = vst.msk [vmem:[%s809 + $0xc] sm:$0xf] %vm687, %v804
        $region92: #{tpu_custom_call.1} parent=71 // pred_fallthru
          _
        %v814 = vld [vmem:[%s517] sm:$0xff]
        %v815 = vld [vmem:[%s517 + $0x8] sm:$0xff]
        %v816 = vld [vmem:[%s517 + $0x10] sm:$0xff]
        %v817 = vld [vmem:[%s517 + $0x18] sm:$0xff]
        %v818 = vld [vmem:[#allocation5] sm:$0x1]
        %v819 = vld [vmem:[%s2] sm:$0x1]
        %vm820 = vcmask 261120
        %v821 = vsel %vm820, %v814, 0.0
        %822 = vadd.xlane.f32.xlu0 %v821
        %v823 = vpop.xlane.xlu0 %822
        %v824 = vsel %vm820, %v815, 0.0
        %825 = vadd.xlane.f32.xlu0 %v824
        %v826 = vpop.xlane.xlu0 %825
        %v827 = vsel %vm820, %v816, 0.0
        %828 = vadd.xlane.f32.xlu0 %v827
        %v829 = vpop.xlane.xlu0 %828
        %v830 = vsel %vm820, %v817, 0.0
        %831 = vadd.xlane.f32.xlu0 %v830
        %v832 = vpop.xlane.xlu0 %831
        %v833 = vrcp.pop 32.0
        %v834 = vmul.f32 32.0, %v833
        %v835 = vsub.f32 1.0, %v834
        %v836 = vmul.f32 %v833, %v835
        %v837 = vadd.f32 %v833, %v836
        %vm838 = vweird.f32 %v833
        %v839 = vsel %vm838, %v833, %v837
        %v840 = vmul.f32 %v823, %v839
        %v841 = vmul.f32 %v826, %v839
        %v842 = vmul.f32 %v829, %v839
        %v843 = vmul.f32 %v832, %v839
        %v844 = vsub.f32 %v814, %v840
        %v845 = vsub.f32 %v815, %v841
        %v846 = vsub.f32 %v816, %v842
        %v847 = vsub.f32 %v817, %v843
        %v848 = vmul.f32 %v844, %v844
        %v849 = vmul.f32 %v845, %v845
        %v850 = vmul.f32 %v846, %v846
        %v851 = vmul.f32 %v847, %v847
        %v852 = vsel %vm820, %v848, 0.0
        %853 = vadd.xlane.f32.xlu0 %v852
        %v854 = vpop.xlane.xlu0 %853
        %v855 = vsel %vm820, %v849, 0.0
        %856 = vadd.xlane.f32.xlu0 %v855
        %v857 = vpop.xlane.xlu0 %856
        %v858 = vsel %vm820, %v850, 0.0
        %859 = vadd.xlane.f32.xlu0 %v858
        %v860 = vpop.xlane.xlu0 %859
        %v861 = vsel %vm820, %v851, 0.0
        %862 = vadd.xlane.f32.xlu0 %v861
        %v863 = vpop.xlane.xlu0 %862
        %v864 = vmul.f32 %v854, %v839
        %v865 = vmul.f32 %v857, %v839
        %v866 = vmul.f32 %v860, %v839
        %v867 = vmul.f32 %v863, %v839
        %v868 = vadd.f32 %v864, 1e-05
        %v869 = vadd.f32 %v865, 1e-05
        %v870 = vadd.f32 %v866, 1e-05
        %v871 = vadd.f32 %v867, 1e-05
        %v872 = vrsqrt.pop %v868
        %v873 = vmul.f32 %v872, %v868
        %v874 = vmul.f32 %v873, %v872
        %v875 = vmul.f32 0.5, %v874
        %v876 = vsub.f32 1.5, %v875
        %v877 = vmul.f32 %v872, %v876
        %vm878 = vweird.f32 %v868
        %vm879 = vweird.f32 %v872
        %vm880 = vmor %vm878, %vm879
        %v881 = vsel %vm880, %v872, %v877
        %v882 = vrsqrt.pop %v869
        %v883 = vmul.f32 %v882, %v869
        %v884 = vmul.f32 %v883, %v882
        %v885 = vmul.f32 0.5, %v884
        %v886 = vsub.f32 1.5, %v885
        %v887 = vmul.f32 %v882, %v886
        %vm888 = vweird.f32 %v869
        %vm889 = vweird.f32 %v882
        %vm890 = vmor %vm888, %vm889
        %v891 = vsel %vm890, %v882, %v887
        %v892 = vrsqrt.pop %v870
        %v893 = vmul.f32 %v892, %v870
        %v894 = vmul.f32 %v893, %v892
        %v895 = vmul.f32 0.5, %v894
        %v896 = vsub.f32 1.5, %v895
        %v897 = vmul.f32 %v892, %v896
        %vm898 = vweird.f32 %v870
        %vm899 = vweird.f32 %v892
        %vm900 = vmor %vm898, %vm899
        %v901 = vsel %vm900, %v892, %v897
        %v902 = vrsqrt.pop %v871
        %v903 = vmul.f32 %v902, %v871
        %v904 = vmul.f32 %v903, %v902
        %v905 = vmul.f32 0.5, %v904
        %v906 = vsub.f32 1.5, %v905
        %v907 = vmul.f32 %v902, %v906
        %vm908 = vweird.f32 %v871
        %vm909 = vweird.f32 %v902
        %vm910 = vmor %vm908, %vm909
        %v911 = vsel %vm910, %v902, %v907
        %v912 = vmul.f32 %v844, %v881
        %v913 = vmul.f32 %v845, %v891
        %v914 = vmul.f32 %v846, %v901
        %v915 = vmul.f32 %v847, %v911
        %v917 = vperm.slane %v818, 0
        %v919 = vmul.f32 %v912, %v917
        %v920 = vmul.f32 %v913, %v917
        %v921 = vmul.f32 %v914, %v917
        %v922 = vmul.f32 %v915, %v917
        %v924 = vperm.slane %v819, 0
        %v926 = vadd.f32 %v919, %v924
        %v927 = vadd.f32 %v920, %v924
        %v928 = vadd.f32 %v921, %v924
        %v929 = vadd.f32 %v922, %v924
        %v930 = vpack.c.bf16 %v927, %v926
        %v931 = vpack.c.bf16 %v929, %v928
        %v932 = vld [vmem:[%s3] sm:$0xf]
        %v933 = vld [vmem:[%s3 + $0x4] sm:$0xf]
        %v934 = vld [vmem:[%s3 + $0x8] sm:$0xf]
        %v935 = vld [vmem:[%s3 + $0xc] sm:$0xf]
        %v940 = vunpack.c.l.b16 %v932
        %v941 = vunpack.c.l.b16 %v933
        %v942 = vunpack.c.l.b16 %v934
        %v943 = vunpack.c.l.b16 %v935
        %v944 = vpack.c.b16 %v941, %v940
        %v945 = vpack.c.b16 %v943, %v942
        %v949 = vsel %vm820, %v930, 0
        %v952 = vsel %vm820, %v931, 0
        %954 = vmatpush.bf16.msra.mxu0 0
        %955 = vmatpush.bf16.msra.mxu0 0
        %956 = vmatpush.bf16.msra.mxu0 0
        %957 = vmatpush.bf16.msra.mxu0 0
        %958 = vmatpush.bf16.msra.mxu0 0
        %959 = vmatpush.bf16.msra.mxu0 0
        %960 = vmatpush.bf16.msra.mxu0 %v945
        %961 = vmatpush.bf16.msra.mxu0 %v944
        %962 = vmatmul.bf16.gmra.mxu0 %v949
        %v963 = vpop.f32.mrf.mxu0
        %v964 = vadd.f32 0.0, %v963
        %v965 = vpop.f32.mrf.mxu0
        %v966 = vadd.f32 0.0, %v965
        %967 = vmatmul.bf16.gmra.mxu0 %v952
        %v968 = vpop.f32.mrf.mxu0
        %v969 = vadd.f32 0.0, %v968
        %v970 = vpop.f32.mrf.mxu0
        %v971 = vadd.f32 0.0, %v970
        %972 = vdwg.mxu0
        %v973 = vmul.f32 %v964, 0.35355338
        %v974 = vmul.f32 %v966, 0.35355338
        %v975 = vmul.f32 %v969, 0.35355338
        %v976 = vmul.f32 %v971, 0.35355338
        %v977 = vpack.c.bf16 %v973, %v973
        %v978 = vpack.c.bf16 %v974, %v974
        %v979 = vpack.c.bf16 %v975, %v975
        %v980 = vpack.c.bf16 %v976, %v976
        %vm981 = vcmask 60416
        %982 = vst.msk [vmem:[#allocation4] sm:$0xf] %vm981, %v977
        %983 = vst.msk [vmem:[#allocation4 + $0x4] sm:$0xf] %vm981, %v978
        %984 = vst.msk [vmem:[#allocation4 + $0x8] sm:$0xf] %vm981, %v979
        %985 = vst.msk [vmem:[#allocation4 + $0xc] sm:$0xf] %vm981, %v980
        %990 = vrot.lane.b32.xlu0 %v977, 120
        %v991 = vpop.permute.xlu0 %990
        %992 = vrot.lane.b32.xlu0 %v978, 120
        %v993 = vpop.permute.xlu0 %992
        %994 = vrot.lane.b32.xlu0 %v979, 120
        %v995 = vpop.permute.xlu0 %994
        %996 = vrot.lane.b32.xlu0 %v980, 120
        %v997 = vpop.permute.xlu0 %996
        %s1002 = scalar_lea.vmem [#allocation4], 16
        %1003 = vst.msk [vmem:[%s1002] sm:$0xf] %vm981, %v991
        %1004 = vst.msk [vmem:[%s1002 + $0x4] sm:$0xf] %vm981, %v993
        %1005 = vst.msk [vmem:[%s1002 + $0x8] sm:$0xf] %vm981, %v995
        %1006 = vst.msk [vmem:[%s1002 + $0xc] sm:$0xf] %vm981, %v997
        %1007 = vrot.lane.b32.xlu0 %v977, 112
        %v1008 = vpop.permute.xlu0 %1007
        %1009 = vrot.lane.b32.xlu0 %v978, 112
        %v1010 = vpop.permute.xlu0 %1009
        %1011 = vrot.lane.b32.xlu0 %v979, 112
        %v1012 = vpop.permute.xlu0 %1011
        %1013 = vrot.lane.b32.xlu0 %v980, 112
        %v1014 = vpop.permute.xlu0 %1013
        %s1019 = scalar_lea.vmem [#allocation4], 32
        %1020 = vst.msk [vmem:[%s1019] sm:$0xf] %vm981, %v1008
        %1021 = vst.msk [vmem:[%s1019 + $0x4] sm:$0xf] %vm981, %v1010
        %1022 = vst.msk [vmem:[%s1019 + $0x8] sm:$0xf] %vm981, %v1012
        %1023 = vst.msk [vmem:[%s1019 + $0xc] sm:$0xf] %vm981, %v1014
        %1024 = vrot.lane.b32.xlu0 %v977, 104
        %v1025 = vpop.permute.xlu0 %1024
        %1026 = vrot.lane.b32.xlu0 %v978, 104
        %v1027 = vpop.permute.xlu0 %1026
        %1028 = vrot.lane.b32.xlu0 %v979, 104
        %v1029 = vpop.permute.xlu0 %1028
        %1030 = vrot.lane.b32.xlu0 %v980, 104
        %v1031 = vpop.permute.xlu0 %1030
        %s1036 = scalar_lea.vmem [#allocation4], 48
        %1037 = vst.msk [vmem:[%s1036] sm:$0xf] %vm981, %v1025
        %1038 = vst.msk [vmem:[%s1036 + $0x4] sm:$0xf] %vm981, %v1027
        %1039 = vst.msk [vmem:[%s1036 + $0x8] sm:$0xf] %vm981, %v1029
        %1040 = vst.msk [vmem:[%s1036 + $0xc] sm:$0xf] %vm981, %v1031
        %v1041 = vld [vmem:[#allocation4] sm:$0xf]
        %v1042 = vld [vmem:[#allocation4 + $0x4] sm:$0xf]
        %v1043 = vld [vmem:[#allocation4 + $0x8] sm:$0xf]
        %v1044 = vld [vmem:[#allocation4 + $0xc] sm:$0xf]
        %v1045 = vld [vmem:[#allocation4 + $0x10] sm:$0xf]
        %v1046 = vld [vmem:[#allocation4 + $0x14] sm:$0xf]
        %v1047 = vld [vmem:[#allocation4 + $0x18] sm:$0xf]
        %v1048 = vld [vmem:[#allocation4 + $0x1c] sm:$0xf]
        %v1049 = vld [vmem:[#allocation4 + $0x20] sm:$0xf]
        %v1050 = vld [vmem:[#allocation4 + $0x24] sm:$0xf]
        %v1051 = vld [vmem:[#allocation4 + $0x28] sm:$0xf]
        %v1052 = vld [vmem:[#allocation4 + $0x2c] sm:$0xf]
        %v1053 = vld [vmem:[#allocation4 + $0x30] sm:$0xf]
        %v1054 = vld [vmem:[#allocation4 + $0x34] sm:$0xf]
        %v1055 = vld [vmem:[#allocation4 + $0x38] sm:$0xf]
        %v1056 = vld [vmem:[#allocation4 + $0x3c] sm:$0xf]
        %v1057 = vld [vmem:[#allocation2] sm:$0xf]
        %v1058 = vld [vmem:[#allocation2 + $0x4] sm:$0xf]
        %v1059 = vld [vmem:[#allocation2 + $0x8] sm:$0xf]
        %v1060 = vld [vmem:[#allocation2 + $0xc] sm:$0xf]
        %v1061 = vld [vmem:[#allocation2 + $0x10] sm:$0xf]
        %v1062 = vld [vmem:[#allocation2 + $0x14] sm:$0xf]
        %v1063 = vld [vmem:[#allocation2 + $0x18] sm:$0xf]
        %v1064 = vld [vmem:[#allocation2 + $0x1c] sm:$0xf]
        %v1065 = vld [vmem:[#allocation2 + $0x20] sm:$0xf]
        %v1066 = vld [vmem:[#allocation2 + $0x24] sm:$0xf]
        %v1067 = vld [vmem:[#allocation2 + $0x28] sm:$0xf]
        %v1068 = vld [vmem:[#allocation2 + $0x2c] sm:$0xf]
        %v1069 = vld [vmem:[#allocation2 + $0x30] sm:$0xf]
        %v1070 = vld [vmem:[#allocation2 + $0x34] sm:$0xf]
        %v1071 = vld [vmem:[#allocation2 + $0x38] sm:$0xf]
        %v1072 = vld [vmem:[#allocation2 + $0x3c] sm:$0xf]
        %v1077 = vunpack.c.l.b16 %v1041
        %v1078 = vunpack.c.l.b16 %v1042
        %v1079 = vunpack.c.l.b16 %v1043
        %v1080 = vunpack.c.l.b16 %v1044
        %v1081 = vpack.c.b16 %v1078, %v1077
        %v1082 = vpack.c.b16 %v1080, %v1079
        %v1087 = vunpack.c.l.b16 %v1057
        %v1088 = vunpack.c.l.b16 %v1058
        %v1089 = vunpack.c.l.b16 %v1059
        %v1090 = vunpack.c.l.b16 %v1060
        %v1091 = vpack.c.b16 %v1088, %v1087
        %v1092 = vpack.c.b16 %v1090, %v1089
        %vm1093 = vcmask 64512
        %v1095 = vsel %vm1093, %v1081, 0
        %v1098 = vsel %vm1093, %v1082, 0
        %v1101 = vsel %vm1093, %v1091, 0
        %v1104 = vsel %vm1093, %v1092, 0
        %1106 = vmatpush.bf16.xpose.msra.mxu0 0
        %1107 = vmatpush.bf16.xpose.msra.mxu0 0
        %1108 = vmatpush.bf16.xpose.msra.mxu0 0
        %1109 = vmatpush.bf16.xpose.msra.mxu0 0
        %1110 = vmatpush.bf16.xpose.msra.mxu0 0
        %1111 = vmatpush.bf16.xpose.msra.mxu0 0
        %1112 = vmatpush.bf16.xpose.msra.mxu0 %v1104
        %1113 = vmatpush.bf16.xpose.msra.mxu0 %v1101
        %1114 = vmatmul.bf16.gmra.mxu0 %v1095
        %v1115 = vpop.f32.mrf.mxu0
        %v1116 = vadd.f32 0.0, %v1115
        %v1117 = vpop.f32.mrf.mxu0
        %v1118 = vadd.f32 0.0, %v1117
        %1119 = vmatmul.bf16.gmra.mxu0 %v1098
        %v1120 = vpop.f32.mrf.mxu0
        %v1121 = vadd.f32 0.0, %v1120
        %v1122 = vpop.f32.mrf.mxu0
        %v1123 = vadd.f32 0.0, %v1122
        %1124 = vdwg.mxu0
        %v1129 = vunpack.c.l.b16 %v1045
        %v1130 = vunpack.c.l.b16 %v1046
        %v1131 = vunpack.c.l.b16 %v1047
        %v1132 = vunpack.c.l.b16 %v1048
        %v1133 = vpack.c.b16 %v1130, %v1129
        %v1134 = vpack.c.b16 %v1132, %v1131
        %v1139 = vunpack.c.l.b16 %v1061
        %v1140 = vunpack.c.l.b16 %v1062
        %v1141 = vunpack.c.l.b16 %v1063
        %v1142 = vunpack.c.l.b16 %v1064
        %v1143 = vpack.c.b16 %v1140, %v1139
        %v1144 = vpack.c.b16 %v1142, %v1141
        %v1146 = vsel %vm1093, %v1133, 0
        %v1149 = vsel %vm1093, %v1134, 0
        %v1152 = vsel %vm1093, %v1143, 0
        %v1155 = vsel %vm1093, %v1144, 0
        %1157 = vmatpush.bf16.xpose.msra.mxu0 0
        %1158 = vmatpush.bf16.xpose.msra.mxu0 0
        %1159 = vmatpush.bf16.xpose.msra.mxu0 0
        %1160 = vmatpush.bf16.xpose.msra.mxu0 0
        %1161 = vmatpush.bf16.xpose.msra.mxu0 0
        %1162 = vmatpush.bf16.xpose.msra.mxu0 0
        %1163 = vmatpush.bf16.xpose.msra.mxu0 %v1155
        %1164 = vmatpush.bf16.xpose.msra.mxu0 %v1152
        %1165 = vmatmul.bf16.gmra.mxu0 %v1146
        %v1166 = vpop.f32.mrf.mxu0
        %v1167 = vadd.f32 0.0, %v1166
        %v1168 = vpop.f32.mrf.mxu0
        %v1169 = vadd.f32 0.0, %v1168
        %1170 = vmatmul.bf16.gmra.mxu0 %v1149
        %v1171 = vpop.f32.mrf.mxu0
        %v1172 = vadd.f32 0.0, %v1171
        %v1173 = vpop.f32.mrf.mxu0
        %v1174 = vadd.f32 0.0, %v1173
        %1175 = vdwg.mxu0
        %v1180 = vunpack.c.l.b16 %v1049
        %v1181 = vunpack.c.l.b16 %v1050
        %v1182 = vunpack.c.l.b16 %v1051
        %v1183 = vunpack.c.l.b16 %v1052
        %v1184 = vpack.c.b16 %v1181, %v1180
        %v1185 = vpack.c.b16 %v1183, %v1182
        %v1190 = vunpack.c.l.b16 %v1065
        %v1191 = vunpack.c.l.b16 %v1066
        %v1192 = vunpack.c.l.b16 %v1067
        %v1193 = vunpack.c.l.b16 %v1068
        %v1194 = vpack.c.b16 %v1191, %v1190
        %v1195 = vpack.c.b16 %v1193, %v1192
        %v1197 = vsel %vm1093, %v1184, 0
        %v1200 = vsel %vm1093, %v1185, 0
        %v1203 = vsel %vm1093, %v1194, 0
        %v1206 = vsel %vm1093, %v1195, 0
        %1208 = vmatpush.bf16.xpose.msra.mxu0 0
        %1209 = vmatpush.bf16.xpose.msra.mxu0 0
        %1210 = vmatpush.bf16.xpose.msra.mxu0 0
        %1211 = vmatpush.bf16.xpose.msra.mxu0 0
        %1212 = vmatpush.bf16.xpose.msra.mxu0 0
        %1213 = vmatpush.bf16.xpose.msra.mxu0 0
        %1214 = vmatpush.bf16.xpose.msra.mxu0 %v1206
        %1215 = vmatpush.bf16.xpose.msra.mxu0 %v1203
        %1216 = vmatmul.bf16.gmra.mxu0 %v1197
        %v1217 = vpop.f32.mrf.mxu0
        %v1218 = vadd.f32 0.0, %v1217
        %v1219 = vpop.f32.mrf.mxu0
        %v1220 = vadd.f32 0.0, %v1219
        %1221 = vmatmul.bf16.gmra.mxu0 %v1200
        %v1222 = vpop.f32.mrf.mxu0
        %v1223 = vadd.f32 0.0, %v1222
        %v1224 = vpop.f32.mrf.mxu0
        %v1225 = vadd.f32 0.0, %v1224
        %1226 = vdwg.mxu0
        %v1231 = vunpack.c.l.b16 %v1053
        %v1232 = vunpack.c.l.b16 %v1054
        %v1233 = vunpack.c.l.b16 %v1055
        %v1234 = vunpack.c.l.b16 %v1056
        %v1235 = vpack.c.b16 %v1232, %v1231
        %v1236 = vpack.c.b16 %v1234, %v1233
        %v1241 = vunpack.c.l.b16 %v1069
        %v1242 = vunpack.c.l.b16 %v1070
        %v1243 = vunpack.c.l.b16 %v1071
        %v1244 = vunpack.c.l.b16 %v1072
        %v1245 = vpack.c.b16 %v1242, %v1241
        %v1246 = vpack.c.b16 %v1244, %v1243
        %v1248 = vsel %vm1093, %v1235, 0
        %v1251 = vsel %vm1093, %v1236, 0
        %v1254 = vsel %vm1093, %v1245, 0
        %v1257 = vsel %vm1093, %v1246, 0
        %1259 = vmatpush.bf16.xpose.msra.mxu0 0
        %1260 = vmatpush.bf16.xpose.msra.mxu0 0
        %1261 = vmatpush.bf16.xpose.msra.mxu0 0
        %1262 = vmatpush.bf16.xpose.msra.mxu0 0
        %1263 = vmatpush.bf16.xpose.msra.mxu0 0
        %1264 = vmatpush.bf16.xpose.msra.mxu0 0
        %1265 = vmatpush.bf16.xpose.msra.mxu0 %v1257
        %1266 = vmatpush.bf16.xpose.msra.mxu0 %v1254
        %1267 = vmatmul.bf16.gmra.mxu0 %v1248
        %v1268 = vpop.f32.mrf.mxu0
        %v1269 = vadd.f32 0.0, %v1268
        %v1270 = vpop.f32.mrf.mxu0
        %v1271 = vadd.f32 0.0, %v1270
        %1272 = vmatmul.bf16.gmra.mxu0 %v1251
        %v1273 = vpop.f32.mrf.mxu0
        %v1274 = vadd.f32 0.0, %v1273
        %v1275 = vpop.f32.mrf.mxu0
        %v1276 = vadd.f32 0.0, %v1275
        %1277 = vdwg.mxu0
        %v1278 = vsel %vm820, %v1116, -inf
        %1279 = vmax.xlane.f32.xlu0 %v1278
        %v1280 = vpop.xlane.xlu0 %1279
        %v1281 = vsel %vm820, %v1118, -inf
        %1282 = vmax.xlane.f32.xlu0 %v1281
        %v1283 = vpop.xlane.xlu0 %1282
        %v1284 = vsel %vm820, %v1121, -inf
        %1285 = vmax.xlane.f32.xlu0 %v1284
        %v1286 = vpop.xlane.xlu0 %1285
        %v1287 = vsel %vm820, %v1123, -inf
        %1288 = vmax.xlane.f32.xlu0 %v1287
        %v1289 = vpop.xlane.xlu0 %1288
        %v1290 = vsel %vm820, %v1167, -inf
        %1291 = vmax.xlane.f32.xlu0 %v1290
        %v1292 = vpop.xlane.xlu0 %1291
        %v1293 = vsel %vm820, %v1169, -inf
        %1294 = vmax.xlane.f32.xlu0 %v1293
        %v1295 = vpop.xlane.xlu0 %1294
        %v1296 = vsel %vm820, %v1172, -inf
        %1297 = vmax.xlane.f32.xlu0 %v1296
        %v1298 = vpop.xlane.xlu0 %1297
        %v1299 = vsel %vm820, %v1174, -inf
        %1300 = vmax.xlane.f32.xlu0 %v1299
        %v1301 = vpop.xlane.xlu0 %1300
        %v1302 = vsel %vm820, %v1218, -inf
        %1303 = vmax.xlane.f32.xlu0 %v1302
        %v1304 = vpop.xlane.xlu0 %1303
        %v1305 = vsel %vm820, %v1220, -inf
        %1306 = vmax.xlane.f32.xlu0 %v1305
        %v1307 = vpop.xlane.xlu0 %1306
        %v1308 = vsel %vm820, %v1223, -inf
        %1309 = vmax.xlane.f32.xlu0 %v1308
        %v1310 = vpop.xlane.xlu0 %1309
        %v1311 = vsel %vm820, %v1225, -inf
        %1312 = vmax.xlane.f32.xlu0 %v1311
        %v1313 = vpop.xlane.xlu0 %1312
        %v1314 = vsel %vm820, %v1269, -inf
        %1315 = vmax.xlane.f32.xlu0 %v1314
        %v1316 = vpop.xlane.xlu0 %1315
        %v1317 = vsel %vm820, %v1271, -inf
        %1318 = vmax.xlane.f32.xlu0 %v1317
        %v1319 = vpop.xlane.xlu0 %1318
        %v1320 = vsel %vm820, %v1274, -inf
        %1321 = vmax.xlane.f32.xlu0 %v1320
        %v1322 = vpop.xlane.xlu0 %1321
        %v1323 = vsel %vm820, %v1276, -inf
        %1324 = vmax.xlane.f32.xlu0 %v1323
        %v1325 = vpop.xlane.xlu0 %1324
        %v1326 = vsub.f32 %v1116, %v1280
        %v1327 = vsub.f32 %v1118, %v1283
        %v1328 = vsub.f32 %v1121, %v1286
        %v1329 = vsub.f32 %v1123, %v1289
        %v1330 = vsub.f32 %v1167, %v1292
        %v1331 = vsub.f32 %v1169, %v1295
        %v1332 = vsub.f32 %v1172, %v1298
        %v1333 = vsub.f32 %v1174, %v1301
        %v1334 = vsub.f32 %v1218, %v1304
        %v1335 = vsub.f32 %v1220, %v1307
        %v1336 = vsub.f32 %v1223, %v1310
        %v1337 = vsub.f32 %v1225, %v1313
        %v1338 = vsub.f32 %v1269, %v1316
        %v1339 = vsub.f32 %v1271, %v1319
        %v1340 = vsub.f32 %v1274, %v1322
        %v1341 = vsub.f32 %v1276, %v1325
        %v1342 = vmul.f32 %v1326, 1.442695
        %v1343 = vpow.pop %v1342
        %v1344 = vmul.f32 %v1327, 1.442695
        %v1345 = vpow.pop %v1344
        %v1346 = vmul.f32 %v1328, 1.442695
        %v1347 = vpow.pop %v1346
        %v1348 = vmul.f32 %v1329, 1.442695
        %v1349 = vpow.pop %v1348
        %v1350 = vmul.f32 %v1330, 1.442695
        %v1351 = vpow.pop %v1350
        %v1352 = vmul.f32 %v1331, 1.442695
        %v1353 = vpow.pop %v1352
        %v1354 = vmul.f32 %v1332, 1.442695
        %v1355 = vpow.pop %v1354
        %v1356 = vmul.f32 %v1333, 1.442695
        %v1357 = vpow.pop %v1356
        %v1358 = vmul.f32 %v1334, 1.442695
        %v1359 = vpow.pop %v1358
        %v1360 = vmul.f32 %v1335, 1.442695
        %v1361 = vpow.pop %v1360
        %v1362 = vmul.f32 %v1336, 1.442695
        %v1363 = vpow.pop %v1362
        %v1364 = vmul.f32 %v1337, 1.442695
        %v1365 = vpow.pop %v1364
        %v1366 = vmul.f32 %v1338, 1.442695
        %v1367 = vpow.pop %v1366
        %v1368 = vmul.f32 %v1339, 1.442695
        %v1369 = vpow.pop %v1368
        %v1370 = vmul.f32 %v1340, 1.442695
        %v1371 = vpow.pop %v1370
        %v1372 = vmul.f32 %v1341, 1.442695
        %v1373 = vpow.pop %v1372
        %v1374 = vsel %vm820, %v1343, 0.0
        %1375 = vadd.xlane.f32.xlu0 %v1374
        %v1376 = vpop.xlane.xlu0 %1375
        %v1377 = vsel %vm820, %v1345, 0.0
        %1378 = vadd.xlane.f32.xlu0 %v1377
        %v1379 = vpop.xlane.xlu0 %1378
        %v1380 = vsel %vm820, %v1347, 0.0
        %1381 = vadd.xlane.f32.xlu0 %v1380
        %v1382 = vpop.xlane.xlu0 %1381
        %v1383 = vsel %vm820, %v1349, 0.0
        %1384 = vadd.xlane.f32.xlu0 %v1383
        %v1385 = vpop.xlane.xlu0 %1384
        %v1386 = vsel %vm820, %v1351, 0.0
        %1387 = vadd.xlane.f32.xlu0 %v1386
        %v1388 = vpop.xlane.xlu0 %1387
        %v1389 = vsel %vm820, %v1353, 0.0
        %1390 = vadd.xlane.f32.xlu0 %v1389
        %v1391 = vpop.xlane.xlu0 %1390
        %v1392 = vsel %vm820, %v1355, 0.0
        %1393 = vadd.xlane.f32.xlu0 %v1392
        %v1394 = vpop.xlane.xlu0 %1393
        %v1395 = vsel %vm820, %v1357, 0.0
        %1396 = vadd.xlane.f32.xlu0 %v1395
        %v1397 = vpop.xlane.xlu0 %1396
        %v1398 = vsel %vm820, %v1359, 0.0
        %1399 = vadd.xlane.f32.xlu0 %v1398
        %v1400 = vpop.xlane.xlu0 %1399
        %v1401 = vsel %vm820, %v1361, 0.0
        %1402 = vadd.xlane.f32.xlu0 %v1401
        %v1403 = vpop.xlane.xlu0 %1402
        %v1404 = vsel %vm820, %v1363, 0.0
        %1405 = vadd.xlane.f32.xlu0 %v1404
        %v1406 = vpop.xlane.xlu0 %1405
        %v1407 = vsel %vm820, %v1365, 0.0
        %1408 = vadd.xlane.f32.xlu0 %v1407
        %v1409 = vpop.xlane.xlu0 %1408
        %v1410 = vsel %vm820, %v1367, 0.0
        %1411 = vadd.xlane.f32.xlu0 %v1410
        %v1412 = vpop.xlane.xlu0 %1411
        %v1413 = vsel %vm820, %v1369, 0.0
        %1414 = vadd.xlane.f32.xlu0 %v1413
        %v1415 = vpop.xlane.xlu0 %1414
        %v1416 = vsel %vm820, %v1371, 0.0
        %1417 = vadd.xlane.f32.xlu0 %v1416
        %v1418 = vpop.xlane.xlu0 %1417
        %v1419 = vsel %vm820, %v1373, 0.0
        %1420 = vadd.xlane.f32.xlu0 %v1419
        %v1421 = vpop.xlane.xlu0 %1420
        %v1422 = vrcp.pop %v1376
        %v1423 = vrcp.pop %v1379
        %v1424 = vrcp.pop %v1382
        %v1425 = vrcp.pop %v1385
        %v1426 = vrcp.pop %v1388
        %v1427 = vrcp.pop %v1391
        %v1428 = vrcp.pop %v1394
        %v1429 = vrcp.pop %v1397
        %v1430 = vrcp.pop %v1400
        %v1431 = vrcp.pop %v1403
        %v1432 = vrcp.pop %v1406
        %v1433 = vrcp.pop %v1409
        %v1434 = vrcp.pop %v1412
        %v1435 = vrcp.pop %v1415
        %v1436 = vrcp.pop %v1418
        %v1437 = vrcp.pop %v1421
        %v1438 = vmul.f32 %v1343, %v1422
        %v1439 = vmul.f32 %v1345, %v1423
        %v1440 = vmul.f32 %v1347, %v1424
        %v1441 = vmul.f32 %v1349, %v1425
        %v1442 = vmul.f32 %v1351, %v1426
        %v1443 = vmul.f32 %v1353, %v1427
        %v1444 = vmul.f32 %v1355, %v1428
        %v1445 = vmul.f32 %v1357, %v1429
        %v1446 = vmul.f32 %v1359, %v1430
        %v1447 = vmul.f32 %v1361, %v1431
        %v1448 = vmul.f32 %v1363, %v1432
        %v1449 = vmul.f32 %v1365, %v1433
        %v1450 = vmul.f32 %v1367, %v1434
        %v1451 = vmul.f32 %v1369, %v1435
        %v1452 = vmul.f32 %v1371, %v1436
        %v1453 = vmul.f32 %v1373, %v1437
        %v1454 = vpack.c.bf16 %v1438, %v1438
        %v1455 = vpack.c.bf16 %v1439, %v1439
        %v1456 = vpack.c.bf16 %v1440, %v1440
        %v1457 = vpack.c.bf16 %v1441, %v1441
        %v1458 = vpack.c.bf16 %v1442, %v1442
        %v1459 = vpack.c.bf16 %v1443, %v1443
        %v1460 = vpack.c.bf16 %v1444, %v1444
        %v1461 = vpack.c.bf16 %v1445, %v1445
        %v1462 = vpack.c.bf16 %v1446, %v1446
        %v1463 = vpack.c.bf16 %v1447, %v1447
        %v1464 = vpack.c.bf16 %v1448, %v1448
        %v1465 = vpack.c.bf16 %v1449, %v1449
        %v1466 = vpack.c.bf16 %v1450, %v1450
        %v1467 = vpack.c.bf16 %v1451, %v1451
        %v1468 = vpack.c.bf16 %v1452, %v1452
        %v1469 = vpack.c.bf16 %v1453, %v1453
        %v1470 = vld [vmem:[#allocation3] sm:$0xf]
        %v1471 = vld [vmem:[#allocation3 + $0x4] sm:$0xf]
        %v1472 = vld [vmem:[#allocation3 + $0x8] sm:$0xf]
        %v1473 = vld [vmem:[#allocation3 + $0xc] sm:$0xf]
        %v1474 = vld [vmem:[#allocation3 + $0x10] sm:$0xf]
        %v1475 = vld [vmem:[#allocation3 + $0x14] sm:$0xf]
        %v1476 = vld [vmem:[#allocation3 + $0x18] sm:$0xf]
        %v1477 = vld [vmem:[#allocation3 + $0x1c] sm:$0xf]
        %v1478 = vld [vmem:[#allocation3 + $0x20] sm:$0xf]
        %v1479 = vld [vmem:[#allocation3 + $0x24] sm:$0xf]
        %v1480 = vld [vmem:[#allocation3 + $0x28] sm:$0xf]
        %v1481 = vld [vmem:[#allocation3 + $0x2c] sm:$0xf]
        %v1482 = vld [vmem:[#allocation3 + $0x30] sm:$0xf]
        %v1483 = vld [vmem:[#allocation3 + $0x34] sm:$0xf]
        %v1484 = vld [vmem:[#allocation3 + $0x38] sm:$0xf]
        %v1485 = vld [vmem:[#allocation3 + $0x3c] sm:$0xf]
        %v1490 = vunpack.c.l.b16 %v1454
        %v1491 = vunpack.c.l.b16 %v1455
        %v1492 = vunpack.c.l.b16 %v1456
        %v1493 = vunpack.c.l.b16 %v1457
        %v1494 = vpack.c.b16 %v1491, %v1490
        %v1495 = vpack.c.b16 %v1493, %v1492
        %v1500 = vunpack.c.l.b16 %v1470
        %v1501 = vunpack.c.l.b16 %v1471
        %v1502 = vunpack.c.l.b16 %v1472
        %v1503 = vunpack.c.l.b16 %v1473
        %v1504 = vpack.c.b16 %v1501, %v1500
        %v1505 = vpack.c.b16 %v1503, %v1502
        %v1509 = vsel %vm820, %v1494, 0
        %v1512 = vsel %vm820, %v1495, 0
        %1514 = vmatpush.bf16.msra.mxu0 0
        %1515 = vmatpush.bf16.msra.mxu0 0
        %1516 = vmatpush.bf16.msra.mxu0 0
        %1517 = vmatpush.bf16.msra.mxu0 0
        %1518 = vmatpush.bf16.msra.mxu0 0
        %1519 = vmatpush.bf16.msra.mxu0 0
        %1520 = vmatpush.bf16.msra.mxu0 %v1505
        %1521 = vmatpush.bf16.msra.mxu0 %v1504
        %1522 = vmatmul.bf16.gmra.mxu0 %v1509
        %v1523 = vpop.f32.mrf.mxu0
        %v1524 = vadd.f32 0.0, %v1523
        %v1525 = vpop.f32.mrf.mxu0
        %v1526 = vadd.f32 0.0, %v1525
        %1527 = vmatmul.bf16.gmra.mxu0 %v1512
        %v1528 = vpop.f32.mrf.mxu0
        %v1529 = vadd.f32 0.0, %v1528
        %v1530 = vpop.f32.mrf.mxu0
        %v1531 = vadd.f32 0.0, %v1530
        %1532 = vdwg.mxu0
        %v1537 = vunpack.c.l.b16 %v1458
        %v1538 = vunpack.c.l.b16 %v1459
        %v1539 = vunpack.c.l.b16 %v1460
        %v1540 = vunpack.c.l.b16 %v1461
        %v1541 = vpack.c.b16 %v1538, %v1537
        %v1542 = vpack.c.b16 %v1540, %v1539
        %v1547 = vunpack.c.l.b16 %v1474
        %v1548 = vunpack.c.l.b16 %v1475
        %v1549 = vunpack.c.l.b16 %v1476
        %v1550 = vunpack.c.l.b16 %v1477
        %v1551 = vpack.c.b16 %v1548, %v1547
        %v1552 = vpack.c.b16 %v1550, %v1549
        %v1556 = vsel %vm820, %v1541, 0
        %v1559 = vsel %vm820, %v1542, 0
        %1561 = vmatpush.bf16.msra.mxu0 0
        %1562 = vmatpush.bf16.msra.mxu0 0
        %1563 = vmatpush.bf16.msra.mxu0 0
        %1564 = vmatpush.bf16.msra.mxu0 0
        %1565 = vmatpush.bf16.msra.mxu0 0
        %1566 = vmatpush.bf16.msra.mxu0 0
        %1567 = vmatpush.bf16.msra.mxu0 %v1552
        %1568 = vmatpush.bf16.msra.mxu0 %v1551
        %1569 = vmatmul.bf16.gmra.mxu0 %v1556
        %v1570 = vpop.f32.mrf.mxu0
        %v1571 = vadd.f32 0.0, %v1570
        %v1572 = vpop.f32.mrf.mxu0
        %v1573 = vadd.f32 0.0, %v1572
        %1574 = vmatmul.bf16.gmra.mxu0 %v1559
        %v1575 = vpop.f32.mrf.mxu0
        %v1576 = vadd.f32 0.0, %v1575
        %v1577 = vpop.f32.mrf.mxu0
        %v1578 = vadd.f32 0.0, %v1577
        %1579 = vdwg.mxu0
        %v1584 = vunpack.c.l.b16 %v1462
        %v1585 = vunpack.c.l.b16 %v1463
        %v1586 = vunpack.c.l.b16 %v1464
        %v1587 = vunpack.c.l.b16 %v1465
        %v1588 = vpack.c.b16 %v1585, %v1584
        %v1589 = vpack.c.b16 %v1587, %v1586
        %v1594 = vunpack.c.l.b16 %v1478
        %v1595 = vunpack.c.l.b16 %v1479
        %v1596 = vunpack.c.l.b16 %v1480
        %v1597 = vunpack.c.l.b16 %v1481
        %v1598 = vpack.c.b16 %v1595, %v1594
        %v1599 = vpack.c.b16 %v1597, %v1596
        %v1603 = vsel %vm820, %v1588, 0
        %v1606 = vsel %vm820, %v1589, 0
        %1608 = vmatpush.bf16.msra.mxu0 0
        %1609 = vmatpush.bf16.msra.mxu0 0
        %1610 = vmatpush.bf16.msra.mxu0 0
        %1611 = vmatpush.bf16.msra.mxu0 0
        %1612 = vmatpush.bf16.msra.mxu0 0
        %1613 = vmatpush.bf16.msra.mxu0 0
        %1614 = vmatpush.bf16.msra.mxu0 %v1599
        %1615 = vmatpush.bf16.msra.mxu0 %v1598
        %1616 = vmatmul.bf16.gmra.mxu0 %v1603
        %v1617 = vpop.f32.mrf.mxu0
        %v1618 = vadd.f32 0.0, %v1617
        %v1619 = vpop.f32.mrf.mxu0
        %v1620 = vadd.f32 0.0, %v1619
        %1621 = vmatmul.bf16.gmra.mxu0 %v1606
        %v1622 = vpop.f32.mrf.mxu0
        %v1623 = vadd.f32 0.0, %v1622
        %v1624 = vpop.f32.mrf.mxu0
        %v1625 = vadd.f32 0.0, %v1624
        %1626 = vdwg.mxu0
        %v1631 = vunpack.c.l.b16 %v1466
        %v1632 = vunpack.c.l.b16 %v1467
        %v1633 = vunpack.c.l.b16 %v1468
        %v1634 = vunpack.c.l.b16 %v1469
        %v1635 = vpack.c.b16 %v1632, %v1631
        %v1636 = vpack.c.b16 %v1634, %v1633
        %v1641 = vunpack.c.l.b16 %v1482
        %v1642 = vunpack.c.l.b16 %v1483
        %v1643 = vunpack.c.l.b16 %v1484
        %v1644 = vunpack.c.l.b16 %v1485
        %v1645 = vpack.c.b16 %v1642, %v1641
        %v1646 = vpack.c.b16 %v1644, %v1643
        %v1650 = vsel %vm820, %v1635, 0
        %v1653 = vsel %vm820, %v1636, 0
        %1655 = vmatpush.bf16.msra.mxu0 0
        %1656 = vmatpush.bf16.msra.mxu0 0
        %1657 = vmatpush.bf16.msra.mxu0 0
        %1658 = vmatpush.bf16.msra.mxu0 0
        %1659 = vmatpush.bf16.msra.mxu0 0
        %1660 = vmatpush.bf16.msra.mxu0 0
        %1661 = vmatpush.bf16.msra.mxu0 %v1646
        %1662 = vmatpush.bf16.msra.mxu0 %v1645
        %1663 = vmatmul.bf16.gmra.mxu0 %v1650
        %v1664 = vpop.f32.mrf.mxu0
        %v1665 = vadd.f32 0.0, %v1664
        %v1666 = vpop.f32.mrf.mxu0
        %v1667 = vadd.f32 0.0, %v1666
        %1668 = vmatmul.bf16.gmra.mxu0 %v1653
        %v1669 = vpop.f32.mrf.mxu0
        %v1670 = vadd.f32 0.0, %v1669
        %v1671 = vpop.f32.mrf.mxu0
        %v1672 = vadd.f32 0.0, %v1671
        %1673 = vdwg.mxu0
        %1678 = vrot.lane.b32.xlu0 %v1571, 8
        %v1679 = vpop.permute.xlu0 %1678
        %1680 = vrot.lane.b32.xlu0 %v1573, 8
        %v1681 = vpop.permute.xlu0 %1680
        %1682 = vrot.lane.b32.xlu0 %v1576, 8
        %v1683 = vpop.permute.xlu0 %1682
        %1684 = vrot.lane.b32.xlu0 %v1578, 8
        %v1685 = vpop.permute.xlu0 %1684
        %1694 = vrot.lane.b32.xlu0 %v1618, 16
        %v1695 = vpop.permute.xlu0 %1694
        %1696 = vrot.lane.b32.xlu0 %v1620, 16
        %v1697 = vpop.permute.xlu0 %1696
        %1698 = vrot.lane.b32.xlu0 %v1623, 16
        %v1699 = vpop.permute.xlu0 %1698
        %1700 = vrot.lane.b32.xlu0 %v1625, 16
        %v1701 = vpop.permute.xlu0 %1700
        %1710 = vrot.lane.b32.xlu0 %v1665, 24
        %v1711 = vpop.permute.xlu0 %1710
        %1712 = vrot.lane.b32.xlu0 %v1667, 24
        %v1713 = vpop.permute.xlu0 %1712
        %1714 = vrot.lane.b32.xlu0 %v1670, 24
        %v1715 = vpop.permute.xlu0 %1714
        %1716 = vrot.lane.b32.xlu0 %v1672, 24
        %v1717 = vpop.permute.xlu0 %1716
        %v1722 = vsel %vm1093, %v1524, %v1679
        %v1723 = vsel %vm1093, %v1526, %v1681
        %v1724 = vsel %vm1093, %v1529, %v1683
        %v1725 = vsel %vm1093, %v1531, %v1685
        %vm1726 = vcmask 130048
        %v1727 = vsel %vm1726, %v1722, %v1695
        %v1728 = vsel %vm1726, %v1723, %v1697
        %v1729 = vsel %vm1726, %v1724, %v1699
        %v1730 = vsel %vm1726, %v1725, %v1701
        %vm1731 = vcmask 195584
        %v1732 = vsel %vm1731, %v1727, %v1711
        %v1733 = vsel %vm1731, %v1728, %v1713
        %v1734 = vsel %vm1731, %v1729, %v1715
        %v1735 = vsel %vm1731, %v1730, %v1717
        %v1736 = vpack.c.bf16 %v1733, %v1732
        %v1737 = vpack.c.bf16 %v1735, %v1734
        %v1738 = vld [vmem:[#allocation10] sm:$0xf]
        %v1739 = vld [vmem:[#allocation10 + $0x4] sm:$0xf]
        %v1740 = vld [vmem:[#allocation10 + $0x8] sm:$0xf]
        %v1741 = vld [vmem:[#allocation10 + $0xc] sm:$0xf]
        %v1742 = vld [vmem:[%s6] sm:$0x1]
        %v1744 = vperm.slane %v1742, 0
        %v1750 = vunpack.c.l.b16 %v1738
        %v1751 = vunpack.c.l.b16 %v1739
        %v1752 = vunpack.c.l.b16 %v1740
        %v1753 = vunpack.c.l.b16 %v1741
        %v1754 = vpack.c.b16 %v1751, %v1750
        %v1755 = vpack.c.b16 %v1753, %v1752
        %v1759 = vsel %vm820, %v1736, 0
        %v1762 = vsel %vm820, %v1737, 0
        %1764 = vmatpush.bf16.msra.mxu0 0
        %1765 = vmatpush.bf16.msra.mxu0 0
        %1766 = vmatpush.bf16.msra.mxu0 0
        %1767 = vmatpush.bf16.msra.mxu0 0
        %1768 = vmatpush.bf16.msra.mxu0 0
        %1769 = vmatpush.bf16.msra.mxu0 0
        %1770 = vmatpush.bf16.msra.mxu0 %v1755
        %1771 = vmatpush.bf16.msra.mxu0 %v1754
        %1772 = vmatmul.bf16.gmra.mxu0 %v1759
        %v1773 = vpop.f32.mrf.mxu0
        %v1774 = vadd.f32 %v1744, %v1773
        %v1775 = vpop.f32.mrf.mxu0
        %v1776 = vadd.f32 %v1744, %v1775
        %1777 = vmatmul.bf16.gmra.mxu0 %v1762
        %v1778 = vpop.f32.mrf.mxu0
        %v1779 = vadd.f32 %v1744, %v1778
        %v1780 = vpop.f32.mrf.mxu0
        %v1781 = vadd.f32 %v1744, %v1780
        %1782 = vdwg.mxu0
        %v1783 = vadd.f32 %v814, %v1774
        %v1784 = vadd.f32 %v815, %v1776
        %v1785 = vadd.f32 %v816, %v1779
        %v1786 = vadd.f32 %v817, %v1781
        %v1787 = vld [vmem:[%s7] sm:$0x1]
        %v1788 = vld [vmem:[%s8] sm:$0x1]
        %v1789 = vsel %vm820, %v1783, 0.0
        %1790 = vadd.xlane.f32.xlu0 %v1789
        %v1791 = vpop.xlane.xlu0 %1790
        %v1792 = vsel %vm820, %v1784, 0.0
        %1793 = vadd.xlane.f32.xlu0 %v1792
        %v1794 = vpop.xlane.xlu0 %1793
        %v1795 = vsel %vm820, %v1785, 0.0
        %1796 = vadd.xlane.f32.xlu0 %v1795
        %v1797 = vpop.xlane.xlu0 %1796
        %v1798 = vsel %vm820, %v1786, 0.0
        %1799 = vadd.xlane.f32.xlu0 %v1798
        %v1800 = vpop.xlane.xlu0 %1799
        %v1801 = vmul.f32 %v1791, %v839
        %v1802 = vmul.f32 %v1794, %v839
        %v1803 = vmul.f32 %v1797, %v839
        %v1804 = vmul.f32 %v1800, %v839
        %v1805 = vsub.f32 %v1783, %v1801
        %v1806 = vsub.f32 %v1784, %v1802
        %v1807 = vsub.f32 %v1785, %v1803
        %v1808 = vsub.f32 %v1786, %v1804
        %v1809 = vmul.f32 %v1805, %v1805
        %v1810 = vmul.f32 %v1806, %v1806
        %v1811 = vmul.f32 %v1807, %v1807
        %v1812 = vmul.f32 %v1808, %v1808
        %v1813 = vsel %vm820, %v1809, 0.0
        %1814 = vadd.xlane.f32.xlu0 %v1813
        %v1815 = vpop.xlane.xlu0 %1814
        %v1816 = vsel %vm820, %v1810, 0.0
        %1817 = vadd.xlane.f32.xlu0 %v1816
        %v1818 = vpop.xlane.xlu0 %1817
        %v1819 = vsel %vm820, %v1811, 0.0
        %1820 = vadd.xlane.f32.xlu0 %v1819
        %v1821 = vpop.xlane.xlu0 %1820
        %v1822 = vsel %vm820, %v1812, 0.0
        %1823 = vadd.xlane.f32.xlu0 %v1822
        %v1824 = vpop.xlane.xlu0 %1823
        %v1825 = vmul.f32 %v1815, %v839
        %v1826 = vmul.f32 %v1818, %v839
        %v1827 = vmul.f32 %v1821, %v839
        %v1828 = vmul.f32 %v1824, %v839
        %v1829 = vadd.f32 %v1825, 1e-05
        %v1830 = vadd.f32 %v1826, 1e-05
        %v1831 = vadd.f32 %v1827, 1e-05
        %v1832 = vadd.f32 %v1828, 1e-05
        %v1833 = vrsqrt.pop %v1829
        %v1834 = vmul.f32 %v1833, %v1829
        %v1835 = vmul.f32 %v1834, %v1833
        %v1836 = vmul.f32 0.5, %v1835
        %v1837 = vsub.f32 1.5, %v1836
        %v1838 = vmul.f32 %v1833, %v1837
        %vm1839 = vweird.f32 %v1829
        %vm1840 = vweird.f32 %v1833
        %vm1841 = vmor %vm1839, %vm1840
        %v1842 = vsel %vm1841, %v1833, %v1838
        %v1843 = vrsqrt.pop %v1830
        %v1844 = vmul.f32 %v1843, %v1830
        %v1845 = vmul.f32 %v1844, %v1843
        %v1846 = vmul.f32 0.5, %v1845
        %v1847 = vsub.f32 1.5, %v1846
        %v1848 = vmul.f32 %v1843, %v1847
        %vm1849 = vweird.f32 %v1830
        %vm1850 = vweird.f32 %v1843
        %vm1851 = vmor %vm1849, %vm1850
        %v1852 = vsel %vm1851, %v1843, %v1848
        %v1853 = vrsqrt.pop %v1831
        %v1854 = vmul.f32 %v1853, %v1831
        %v1855 = vmul.f32 %v1854, %v1853
        %v1856 = vmul.f32 0.5, %v1855
        %v1857 = vsub.f32 1.5, %v1856
        %v1858 = vmul.f32 %v1853, %v1857
        %vm1859 = vweird.f32 %v1831
        %vm1860 = vweird.f32 %v1853
        %vm1861 = vmor %vm1859, %vm1860
        %v1862 = vsel %vm1861, %v1853, %v1858
        %v1863 = vrsqrt.pop %v1832
        %v1864 = vmul.f32 %v1863, %v1832
        %v1865 = vmul.f32 %v1864, %v1863
        %v1866 = vmul.f32 0.5, %v1865
        %v1867 = vsub.f32 1.5, %v1866
        %v1868 = vmul.f32 %v1863, %v1867
        %vm1869 = vweird.f32 %v1832
        %vm1870 = vweird.f32 %v1863
        %vm1871 = vmor %vm1869, %vm1870
        %v1872 = vsel %vm1871, %v1863, %v1868
        %v1873 = vmul.f32 %v1805, %v1842
        %v1874 = vmul.f32 %v1806, %v1852
        %v1875 = vmul.f32 %v1807, %v1862
        %v1876 = vmul.f32 %v1808, %v1872
        %v1878 = vperm.slane %v1787, 0
        %v1880 = vmul.f32 %v1873, %v1878
        %v1881 = vmul.f32 %v1874, %v1878
        %v1882 = vmul.f32 %v1875, %v1878
        %v1883 = vmul.f32 %v1876, %v1878
        %v1885 = vperm.slane %v1788, 0
        %v1887 = vadd.f32 %v1880, %v1885
        %v1888 = vadd.f32 %v1881, %v1885
        %v1889 = vadd.f32 %v1882, %v1885
        %v1890 = vadd.f32 %v1883, %v1885
        %v1891 = vpack.c.bf16 %v1888, %v1887
        %v1892 = vpack.c.bf16 %v1890, %v1889
        %v1893 = vld [vmem:[#allocation11] sm:$0xf]
        %v1894 = vld [vmem:[#allocation11 + $0x4] sm:$0xf]
        %v1895 = vld [vmem:[#allocation11 + $0x8] sm:$0xf]
        %v1896 = vld [vmem:[#allocation11 + $0xc] sm:$0xf]
        %v1897 = vld [vmem:[%s10] sm:$0x1]
        %v1899 = vperm.slane %v1897, 0
        %v1905 = vunpack.c.l.b16 %v1893
        %v1906 = vunpack.c.l.b16 %v1894
        %v1907 = vunpack.c.l.b16 %v1895
        %v1908 = vunpack.c.l.b16 %v1896
        %v1909 = vpack.c.b16 %v1906, %v1905
        %v1910 = vpack.c.b16 %v1908, %v1907
        %v1914 = vsel %vm820, %v1891, 0
        %v1917 = vsel %vm820, %v1892, 0
        %1919 = vmatpush.bf16.msra.mxu0 0
        %1920 = vmatpush.bf16.msra.mxu0 0
        %1921 = vmatpush.bf16.msra.mxu0 0
        %1922 = vmatpush.bf16.msra.mxu0 0
        %1923 = vmatpush.bf16.msra.mxu0 0
        %1924 = vmatpush.bf16.msra.mxu0 0
        %1925 = vmatpush.bf16.msra.mxu0 %v1910
        %1926 = vmatpush.bf16.msra.mxu0 %v1909
        %1927 = vmatmul.bf16.gmra.mxu0 %v1914
        %v1928 = vpop.f32.mrf.mxu0
        %v1929 = vadd.f32 %v1899, %v1928
        %v1930 = vpop.f32.mrf.mxu0
        %v1931 = vadd.f32 %v1899, %v1930
        %1932 = vmatmul.bf16.gmra.mxu0 %v1917
        %v1933 = vpop.f32.mrf.mxu0
        %v1934 = vadd.f32 %v1899, %v1933
        %v1935 = vpop.f32.mrf.mxu0
        %v1936 = vadd.f32 %v1899, %v1935
        %1937 = vdwg.mxu0
        %v1938 = vmul.f32 %v1929, 0.5
        %v1939 = vmul.f32 %v1931, 0.5
        %v1940 = vmul.f32 %v1934, 0.5
        %v1941 = vmul.f32 %v1936, 0.5
        %v1942 = vmul.f32 %v1929, 0.70710677
        %v1943 = vmul.f32 %v1931, 0.70710677
        %v1944 = vmul.f32 %v1934, 0.70710677
        %v1945 = vmul.f32 %v1936, 0.70710677
        %v1946 = vmul.f32 %v1942, %v1942
        %v1947 = vmin.f32 16.0, %v1946
        %v1948 = vmul.f32 %v1947, 2.1237322e-06
        %v1949 = vadd.f32 %v1948, 0.00028619796
        %v1950 = vmul.f32 %v1947, %v1949
        %v1951 = vadd.f32 %v1950, 0.0036580483
        %v1952 = vmul.f32 %v1947, %v1951
        %v1953 = vadd.f32 %v1952, 0.05243302
        %v1954 = vmul.f32 %v1947, %v1953
        %v1955 = vadd.f32 %v1954, 0.18741608
        %v1956 = vmul.f32 %v1947, %v1955
        %v1957 = vadd.f32 %v1956, 1.1283791
        %v1958 = vmul.f32 %v1942, %v1957
        %v1959 = vmul.f32 %v1947, 3.8918573e-05
        %v1960 = vadd.f32 %v1959, 0.001143296
        %v1961 = vmul.f32 %v1947, %v1960
        %v1962 = vadd.f32 %v1961, 0.014752088
        %v1963 = vmul.f32 %v1947, %v1962
        %v1964 = vadd.f32 %v1963, 0.112945676
        %v1965 = vmul.f32 %v1947, %v1964
        %v1966 = vadd.f32 %v1965, 0.4994258
        %v1967 = vmul.f32 %v1947, %v1966
        %v1968 = vadd.f32 %v1967, 1.0
        %v1969 = vrcp.pop %v1968
        %v1970 = vmul.f32 %v1968, %v1969
        %v1971 = vsub.f32 1.0, %v1970
        %v1972 = vmul.f32 %v1969, %v1971
        %v1973 = vadd.f32 %v1969, %v1972
        %vm1974 = vweird.f32 %v1968
        %vm1975 = vweird.f32 %v1969
        %vm1976 = vmor %vm1974, %vm1975
        %v1977 = vsel %vm1976, %v1969, %v1973
        %v1978 = vand.u32 2147483647, %v1968
        %vm1979 = vcmp.eq.f32.partialorder %v1978, 8.507059e+37
        %v1980 = vand.u32 %v1968, 2147483648
        %v1981 = vor.u32 1.1754944e-38, %v1980
        %v1982 = vsel %vm1979, %v1981, %v1977
        %v1983 = vmul.f32 %v1958, %v1982
        %v1984 = vmin.f32 %v1983, 1.0
        %v1985 = vmax.f32 %v1984, -1.0
        %v1986 = vmul.f32 %v1943, %v1943
        %v1987 = vmin.f32 16.0, %v1986
        %v1988 = vmul.f32 %v1987, 2.1237322e-06
        %v1989 = vadd.f32 %v1988, 0.00028619796
        %v1990 = vmul.f32 %v1987, %v1989
        %v1991 = vadd.f32 %v1990, 0.0036580483
        %v1992 = vmul.f32 %v1987, %v1991
        %v1993 = vadd.f32 %v1992, 0.05243302
        %v1994 = vmul.f32 %v1987, %v1993
        %v1995 = vadd.f32 %v1994, 0.18741608
        %v1996 = vmul.f32 %v1987, %v1995
        %v1997 = vadd.f32 %v1996, 1.1283791
        %v1998 = vmul.f32 %v1943, %v1997
        %v1999 = vmul.f32 %v1987, 3.8918573e-05
        %v2000 = vadd.f32 %v1999, 0.001143296
        %v2001 = vmul.f32 %v1987, %v2000
        %v2002 = vadd.f32 %v2001, 0.014752088
        %v2003 = vmul.f32 %v1987, %v2002
        %v2004 = vadd.f32 %v2003, 0.112945676
        %v2005 = vmul.f32 %v1987, %v2004
        %v2006 = vadd.f32 %v2005, 0.4994258
        %v2007 = vmul.f32 %v1987, %v2006
        %v2008 = vadd.f32 %v2007, 1.0
        %v2009 = vrcp.pop %v2008
        %v2010 = vmul.f32 %v2008, %v2009
        %v2011 = vsub.f32 1.0, %v2010
        %v2012 = vmul.f32 %v2009, %v2011
        %v2013 = vadd.f32 %v2009, %v2012
        %vm2014 = vweird.f32 %v2008
        %vm2015 = vweird.f32 %v2009
        %vm2016 = vmor %vm2014, %vm2015
        %v2017 = vsel %vm2016, %v2009, %v2013
        %v2018 = vand.u32 2147483647, %v2008
        %vm2019 = vcmp.eq.f32.partialorder %v2018, 8.507059e+37
        %v2020 = vand.u32 %v2008, 2147483648
        %v2021 = vor.u32 1.1754944e-38, %v2020
        %v2022 = vsel %vm2019, %v2021, %v2017
        %v2023 = vmul.f32 %v1998, %v2022
        %v2024 = vmin.f32 %v2023, 1.0
        %v2025 = vmax.f32 %v2024, -1.0
        %v2026 = vmul.f32 %v1944, %v1944
        %v2027 = vmin.f32 16.0, %v2026
        %v2028 = vmul.f32 %v2027, 2.1237322e-06
        %v2029 = vadd.f32 %v2028, 0.00028619796
        %v2030 = vmul.f32 %v2027, %v2029
        %v2031 = vadd.f32 %v2030, 0.0036580483
        %v2032 = vmul.f32 %v2027, %v2031
        %v2033 = vadd.f32 %v2032, 0.05243302
        %v2034 = vmul.f32 %v2027, %v2033
        %v2035 = vadd.f32 %v2034, 0.18741608
        %v2036 = vmul.f32 %v2027, %v2035
        %v2037 = vadd.f32 %v2036, 1.1283791
        %v2038 = vmul.f32 %v1944, %v2037
        %v2039 = vmul.f32 %v2027, 3.8918573e-05
        %v2040 = vadd.f32 %v2039, 0.001143296
        %v2041 = vmul.f32 %v2027, %v2040
        %v2042 = vadd.f32 %v2041, 0.014752088
        %v2043 = vmul.f32 %v2027, %v2042
        %v2044 = vadd.f32 %v2043, 0.112945676
        %v2045 = vmul.f32 %v2027, %v2044
        %v2046 = vadd.f32 %v2045, 0.4994258
        %v2047 = vmul.f32 %v2027, %v2046
        %v2048 = vadd.f32 %v2047, 1.0
        %v2049 = vrcp.pop %v2048
        %v2050 = vmul.f32 %v2048, %v2049
        %v2051 = vsub.f32 1.0, %v2050
        %v2052 = vmul.f32 %v2049, %v2051
        %v2053 = vadd.f32 %v2049, %v2052
        %vm2054 = vweird.f32 %v2048
        %vm2055 = vweird.f32 %v2049
        %vm2056 = vmor %vm2054, %vm2055
        %v2057 = vsel %vm2056, %v2049, %v2053
        %v2058 = vand.u32 2147483647, %v2048
        %vm2059 = vcmp.eq.f32.partialorder %v2058, 8.507059e+37
        %v2060 = vand.u32 %v2048, 2147483648
        %v2061 = vor.u32 1.1754944e-38, %v2060
        %v2062 = vsel %vm2059, %v2061, %v2057
        %v2063 = vmul.f32 %v2038, %v2062
        %v2064 = vmin.f32 %v2063, 1.0
        %v2065 = vmax.f32 %v2064, -1.0
        %v2066 = vmul.f32 %v1945, %v1945
        %v2067 = vmin.f32 16.0, %v2066
        %v2068 = vmul.f32 %v2067, 2.1237322e-06
        %v2069 = vadd.f32 %v2068, 0.00028619796
        %v2070 = vmul.f32 %v2067, %v2069
        %v2071 = vadd.f32 %v2070, 0.0036580483
        %v2072 = vmul.f32 %v2067, %v2071
        %v2073 = vadd.f32 %v2072, 0.05243302
        %v2074 = vmul.f32 %v2067, %v2073
        %v2075 = vadd.f32 %v2074, 0.18741608
        %v2076 = vmul.f32 %v2067, %v2075
        %v2077 = vadd.f32 %v2076, 1.1283791
        %v2078 = vmul.f32 %v1945, %v2077
        %v2079 = vmul.f32 %v2067, 3.8918573e-05
        %v2080 = vadd.f32 %v2079, 0.001143296
        %v2081 = vmul.f32 %v2067, %v2080
        %v2082 = vadd.f32 %v2081, 0.014752088
        %v2083 = vmul.f32 %v2067, %v2082
        %v2084 = vadd.f32 %v2083, 0.112945676
        %v2085 = vmul.f32 %v2067, %v2084
        %v2086 = vadd.f32 %v2085, 0.4994258
        %v2087 = vmul.f32 %v2067, %v2086
        %v2088 = vadd.f32 %v2087, 1.0
        %v2089 = vrcp.pop %v2088
        %v2090 = vmul.f32 %v2088, %v2089
        %v2091 = vsub.f32 1.0, %v2090
        %v2092 = vmul.f32 %v2089, %v2091
        %v2093 = vadd.f32 %v2089, %v2092
        %vm2094 = vweird.f32 %v2088
        %vm2095 = vweird.f32 %v2089
        %vm2096 = vmor %vm2094, %vm2095
        %v2097 = vsel %vm2096, %v2089, %v2093
        %v2098 = vand.u32 2147483647, %v2088
        %vm2099 = vcmp.eq.f32.partialorder %v2098, 8.507059e+37
        %v2100 = vand.u32 %v2088, 2147483648
        %v2101 = vor.u32 1.1754944e-38, %v2100
        %v2102 = vsel %vm2099, %v2101, %v2097
        %v2103 = vmul.f32 %v2078, %v2102
        %v2104 = vmin.f32 %v2103, 1.0
        %v2105 = vmax.f32 %v2104, -1.0
        %v2106 = vadd.f32 %v1985, 1.0
        %v2107 = vadd.f32 %v2025, 1.0
        %v2108 = vadd.f32 %v2065, 1.0
        %v2109 = vadd.f32 %v2105, 1.0
        %v2110 = vmul.f32 %v1938, %v2106
        %v2111 = vmul.f32 %v1939, %v2107
        %v2112 = vmul.f32 %v1940, %v2108
        %v2113 = vmul.f32 %v1941, %v2109
        %v2114 = vpack.c.bf16 %v2111, %v2110
        %v2115 = vpack.c.bf16 %v2113, %v2112
        %v2116 = vld [vmem:[%s11] sm:$0xf]
        %v2117 = vld [vmem:[%s11 + $0x4] sm:$0xf]
        %v2118 = vld [vmem:[%s11 + $0x8] sm:$0xf]
        %v2119 = vld [vmem:[%s11 + $0xc] sm:$0xf]
        %v2120 = vld [vmem:[%s11 + $0x10] sm:$0xf]
        %v2121 = vld [vmem:[%s11 + $0x14] sm:$0xf]
        %v2122 = vld [vmem:[%s11 + $0x18] sm:$0xf]
        %v2123 = vld [vmem:[%s11 + $0x1c] sm:$0xf]
        %v2124 = vld [vmem:[%s11 + $0x20] sm:$0xf]
        %v2125 = vld [vmem:[%s11 + $0x24] sm:$0xf]
        %v2126 = vld [vmem:[%s11 + $0x28] sm:$0xf]
        %v2127 = vld [vmem:[%s11 + $0x2c] sm:$0xf]
        %v2128 = vld [vmem:[%s11 + $0x30] sm:$0xf]
        %v2129 = vld [vmem:[%s11 + $0x34] sm:$0xf]
        %v2130 = vld [vmem:[%s11 + $0x38] sm:$0xf]
        %v2131 = vld [vmem:[%s11 + $0x3c] sm:$0xf]
        %v2132 = vld [vmem:[%s12] sm:$0x1]
        %v2134 = vperm.slane %v2132, 0
        %v2152 = vunpack.c.l.b16 %v2116
        %v2153 = vunpack.c.l.b16 %v2117
        %v2154 = vunpack.c.l.b16 %v2118
        %v2155 = vunpack.c.l.b16 %v2119
        %v2156 = vunpack.c.l.b16 %v2120
        %v2157 = vunpack.c.l.b16 %v2121
        %v2158 = vunpack.c.l.b16 %v2122
        %v2159 = vunpack.c.l.b16 %v2123
        %v2160 = vunpack.c.l.b16 %v2124
        %v2161 = vunpack.c.l.b16 %v2125
        %v2162 = vunpack.c.l.b16 %v2126
        %v2163 = vunpack.c.l.b16 %v2127
        %v2164 = vunpack.c.l.b16 %v2128
        %v2165 = vunpack.c.l.b16 %v2129
        %v2166 = vunpack.c.l.b16 %v2130
        %v2167 = vunpack.c.l.b16 %v2131
        %v2168 = vpack.c.b16 %v2153, %v2152
        %v2169 = vpack.c.b16 %v2155, %v2154
        %v2170 = vpack.c.b16 %v2157, %v2156
        %v2171 = vpack.c.b16 %v2159, %v2158
        %v2172 = vpack.c.b16 %v2161, %v2160
        %v2173 = vpack.c.b16 %v2163, %v2162
        %v2174 = vpack.c.b16 %v2165, %v2164
        %v2175 = vpack.c.b16 %v2167, %v2166
        %2184 = vmatpush.bf16.msra.mxu0 %v2175
        %2185 = vmatpush.bf16.msra.mxu0 %v2174
        %2186 = vmatpush.bf16.msra.mxu0 %v2173
        %2187 = vmatpush.bf16.msra.mxu0 %v2172
        %2188 = vmatpush.bf16.msra.mxu0 %v2171
        %2189 = vmatpush.bf16.msra.mxu0 %v2170
        %2190 = vmatpush.bf16.msra.mxu0 %v2169
        %2191 = vmatpush.bf16.msra.mxu0 %v2168
        %2192 = vmatmul.bf16.gmra.mxu0 %v2114
        %v2193 = vpop.f32.mrf.mxu0
        %v2194 = vadd.f32 %v2134, %v2193
        %v2195 = vpop.f32.mrf.mxu0
        %v2196 = vadd.f32 %v2134, %v2195
        %2197 = vmatmul.bf16.gmra.mxu0 %v2115
        %v2198 = vpop.f32.mrf.mxu0
        %v2199 = vadd.f32 %v2134, %v2198
        %v2200 = vpop.f32.mrf.mxu0
        %v2201 = vadd.f32 %v2134, %v2200
        %2202 = vdwg.mxu0
        %v2203 = vadd.f32 %v1783, %v2194
        %v2204 = vadd.f32 %v1784, %v2196
        %v2205 = vadd.f32 %v1785, %v2199
        %v2206 = vadd.f32 %v1786, %v2201
        %2207 = vst.msk [vmem:[%s512] sm:$0xff] %vm820, %v2203
        %2208 = vst.msk [vmem:[%s512 + $0x8] sm:$0xff] %vm820, %v2204
        %2209 = vst.msk [vmem:[%s512 + $0x10] sm:$0xff] %vm820, %v2205
        %2210 = vst.msk [vmem:[%s512 + $0x18] sm:$0xff] %vm820, %v2206
        %s2211 = sand.u32 %s330, 1
        %s2212 = scalar_lea.sflag [#allocation7], %s2211
        %s2213 = sand.u32 %s330, 1
        %s2214 = smul.addr %s2213, 32
        %s2215 = scalar_lea.vmem [#allocation13], %s2214
        // Predicated region
        $region93: #{tpu_custom_call.1} parent=71 // pred_check
          %p2216 = pneg %p340
        $region94: #{tpu_custom_call.1} parent=71 // pred_check_branch
          %2218 = sbr.rel (%p2216) target = $region96
        $region95: #{tpu_custom_call.1} parent=71 // pred_region
          %s2219 = smul.u32 4, %s35
          %2221 = vsyncadd %s2212, 0
          %s2222 = smul.addr %s34, 4
          %s2223 = sadd.s32 %s2219, %s2222
          %s2224 = smul.addr %s2223, 8
          %s2225 = scalar_lea.hbm %s13, %s2224
          %s2226 = sshll.u32 %s2215, 4
          %s2227 = int_to_ptr.vmem [resolvable:$true] %s2226
          %s2228 = sshll.u32 %s2225, 4
          %s2229 = int_to_ptr.hbm [resolvable:$true] %s2228
          %2234 = dma.vmem_to_hbm [thread:$0]  %s2227, 512, %s2229, %s2212, 128, 128, 8
        $region96: #{tpu_custom_call.1} parent=71 // pred_fallthru
          _
      $region72: #{tpu_custom_call.1} parent=5 // pred_fallthru
        _
      %p2235 = scmp.le.s32.totalorder 2, %s25
      // Predicated region
      $region97: #{tpu_custom_call.1} parent=5 // pred_check
        %p2236 = pneg %p2235
      $region98: #{tpu_custom_call.1} parent=5 // pred_check_branch
        %2238 = sbr.rel (%p2236) target = $region100
      $region99: #{tpu_custom_call.1} parent=5 // pred_region
        %s2239 = ssub.s32 %s25, 2
        // Predicated region
        $region101: #{tpu_custom_call.1} parent=99 // pred_check
          %p2240 = pneg %p346
        $region102: #{tpu_custom_call.1} parent=99 // pred_check_branch
          %2242 = sbr.rel (%p2240) target = $region104
        $region103: #{tpu_custom_call.1} parent=99 // pred_region
          %s2243 = sand.u32 %s331, 1
          %s2244 = scalar_lea.sflag [#allocation7], %s2243
          %s2245 = sand.u32 %s331, 1
          %s2246 = smul.addr %s2245, 32
          %s2247 = scalar_lea.vmem [#allocation13], %s2246
          %2249 = dma.done %s2244, 512
        $region104: #{tpu_custom_call.1} parent=99 // pred_fallthru
          _
      $region100: #{tpu_custom_call.1} parent=5 // pred_fallthru
        _
    $region6: #{tpu_custom_call.1} parent=1 // loop_footer
      %s29 = sadd.s32 1, %s25
    $region7: #{tpu_custom_call.1} parent=1 // loop_footer_branch
      %24 = sbr.rel target = $region3
    $region8: #{tpu_custom_call.1} parent=1 // loop_exit
      _
    %2250 = vsyncpa [#allocation6], 1
    %s2251 = scalar_lea.sflag [#allocation6], 1
    %2252 = vsyncpa %s2251, 1
    %2253 = vsyncpa [#allocation9], 1
    %2254 = vsyncpa [#allocation12], 1
    %2255 = vsyncpa [#allocation7], 1
    %s2256 = scalar_lea.sflag [#allocation7], 1
    %2257 = vsyncpa %s2256, 1

</llo_original>
